<compile_context>
chip_gen: v7x
topology: tpu7x:2x2x1
jax: 0.10.0
libtpu: 0.0.40
codegen_flags: <defaults>
</compile_context>

<pallas_src>
import numpy as np
import jax
import jax.numpy as jnp
from jax.experimental import pallas as pl
from jax.experimental.pallas import tpu as pltpu


def _bilinear_matrix(n_in, n_out):
    """Interpolation matrix (n_out, n_in) for align_corners=True bilinear."""
    m = np.zeros((n_out, n_in), dtype=np.float32)
    if n_out == 1 or n_in == 1:
        m[:, 0] = 1.0
        return m
    scale = (n_in - 1) / (n_out - 1)
    for o in range(n_out):
        src = o * scale
        i0 = min(int(np.floor(src)), n_in - 1)
        i1 = min(i0 + 1, n_in - 1)
        f = src - i0
        m[o, i0] += 1.0 - f
        m[o, i1] += f
    return m


def _shift_masks(H, W):
    """(9, 1, H*W) validity masks for the 9 taps of a 3x3 SAME conv.

    Channel- and batch-invariant; they also zero the positions where the
    flattened lane roll wraps around (row-crossing / sample wrap)."""
    hh = np.arange(H)[:, None]
    ww = np.arange(W)[None, :]
    masks = np.zeros((9, 1, H * W), dtype=np.float32)
    for dh in range(3):
        for dw in range(3):
            k = dh * 3 + dw
            valid = ((hh + dh - 1 >= 0) & (hh + dh - 1 < H)
                     & (ww + dw - 1 >= 0) & (ww + dw - 1 < W))
            masks[k, 0, :] = valid.reshape(H * W).astype(np.float32)
    return masks


def upsample_b_pallas(x, skip, params, tgt_size):
    B, C, Hin, Win = x.shape
    Hout, Wout = tgt_size
    M, N = Hin * Win, Hout * Wout
    R = B * C                                   # fused batch*channel row axis
    assert skip.shape == (B, C, Hout, Wout)
    # Fused upsample operator is O(M*N) bytes; only acceptable at toy sizes.
    # TODO(synk): for realistic spatial shapes replace it with the separable
    # row-then-column interpolation (two matmuls) + spatial tiling (v7x VMEM).
    assert M * N * 4 <= (4 << 20), "fused kron upsample operator too large"

    # ---- host-side constant operators (layout plumbing, not compute) ----
    rh = _bilinear_matrix(Hin, Hout)                      # (Hout, Hin)
    rw = _bilinear_matrix(Win, Wout)                      # (Wout, Win)
    rT = jnp.asarray(np.kron(rh, rw).T)                   # (M, N) upsample op
    masks = jnp.asarray(_shift_masks(Hout, Wout))         # (9, 1, N)

    eye_b = jnp.eye(B, dtype=jnp.float32)

    def tap_weights(w):
        # OIHW (C,C,3,3) -> (9, B*C, B*C): per-tap weight, block-diagonal over
        # the fused batch so each tap is one plain 2-D MXU dot.
        wk = jnp.transpose(w, (2, 3, 0, 1)).reshape(9, C, C)     # (k, co, ci)
        return jnp.einsum("bd,koc->kbodc", eye_b, wk).reshape(9, R, R)

    w1t = tap_weights(params["w1"])
    w2t = tap_weights(params["w2"])
    b1r = jnp.tile(params["b1"], B).reshape(R, 1)
    b2r = jnp.tile(params["b2"], B).reshape(R, 1)

    x2 = x.reshape(R, M)          # rows = (b, c), lanes = flattened Hin*Win
    skip2 = skip.reshape(R, N)    # rows = (b, c), lanes = flattened Hout*Wout

    # flattened-spatial shift for each (dh, dw) tap of the 3x3 kernel
    shifts = tuple((dh - 1) * Wout + (dw - 1)
                   for dh in range(3) for dw in range(3))

    def kernel(x_ref, skip_ref, rT_ref, mask_ref, w1_ref, b1_ref,
               w2_ref, b2_ref, o_ref):
        # ---- bilinear upsample (align_corners=True), all samples/channels ----
        up = jnp.dot(x_ref[...], rT_ref[...],
                     preferred_element_type=jnp.float32)             # (R, N)
        z = (up + 1.0) * skip_ref[...]                                # (R, N)

        # ---- 3x3 SAME conv: 9 accumulated MXU dots, everything in vregs ----
        def conv3x3(v, w_ref, b_ref):
            acc = jnp.broadcast_to(b_ref[...], (R, N))   # bias as accum init
            for k, s in enumerate(shifts):
                if s == 0:
                    piece = v                            # center tap
                else:
                    # neighbor tap: lane rotation (XLU slot) + border mask;
                    # the mask also zeroes the roll wrap / row-crossing lanes.
                    piece = pltpu.roll(v, shift=(-s) % N, axis=1) * mask_ref[k]
                acc = acc + jnp.dot(w_ref[k], piece,
                                    preferred_element_type=jnp.float32)
            return acc

        h = jnp.maximum(conv3x3(z, w1_ref, b1_ref), 0.0)
        y = conv3x3(h, w2_ref, b2_ref)
        o_ref[...] = jnp.maximum(y + z, 0.0).astype(o_ref.dtype)  # 256-lane vst

    # Single grid step (grid collapsed): every operand fits comfortably in
    # VMEM (~100 KiB total), all dots are batched over B*C rows.
    out = pl.pallas_call(
        kernel,
        out_shape=jax.ShapeDtypeStruct((R, N), jnp.float32),
    )(x2, skip2, rT, masks, w1t, b1r, w2t, b2r)

    return out.reshape(B, C, Hout, Wout)


def upsample_b_reference(x, skip, params, tgt_size):
    """Pure-JAX reference for correctness checking."""
    B, C, Hin, Win = x.shape
    Hout, Wout = tgt_size
    rh = jnp.asarray(_bilinear_matrix(Hin, Hout))
    rw = jnp.asarray(_bilinear_matrix(Win, Wout))
    up = jnp.einsum("oh,pw,bchw->bcop", rh, rw, x)
    z = (up + 1.0) * skip

    def conv(v, w, b):
        y = jax.lax.conv_general_dilated(
            v, w, window_strides=(1, 1), padding="SAME",
            dimension_numbers=("NCHW", "OIHW", "NCHW"))
        return y + b[None, :, None, None]

    h = jax.nn.relu(conv(z, params["w1"], params["b1"]))
    y = conv(h, params["w2"], params["b2"])
    return jax.nn.relu(y + z)


if __name__ == "__main__":
    B, C = 2, 4
    Hin, Win = 8, 8
    tgt_size = (16, 16)
    Hout, Wout = tgt_size

    key = jax.random.PRNGKey(0)
    k_x, k_skip, k_w1, k_b1, k_w2, k_b2 = jax.random.split(key, 6)

    x = jax.random.normal(k_x, (B, C, Hin, Win), jnp.float32)
    skip = jax.random.normal(k_skip, (B, C, Hout, Wout), jnp.float32)

    params = {
        "w1": 0.2 * jax.random.normal(k_w1, (C, C, 3, 3), jnp.float32),  # OIHW
        "b1": 0.1 * jax.random.normal(k_b1, (C,), jnp.float32),
        "w2": 0.2 * jax.random.normal(k_w2, (C, C, 3, 3), jnp.float32),
        "b2": 0.1 * jax.random.normal(k_b2, (C,), jnp.float32),
    }

    out = upsample_b_pallas(x, skip, params, tgt_size)
    out = jax.block_until_ready(out)

    ref = upsample_b_reference(x, skip, params, tgt_size)
    np.testing.assert_allclose(np.asarray(out), np.asarray(ref),
                               rtol=1e-4, atol=1e-4)

    print("KERNEL_OK")
</pallas_src>

<mosaic_0001>
module attributes {stable_mosaic.version = 11 : i64} {
  func.func @kernel(%arg0: memref<8x64xf32, #tpu.memory_space<vmem>>, %arg1: memref<8x256xf32, #tpu.memory_space<vmem>>, %arg2: memref<64x256xf32, #tpu.memory_space<vmem>>, %arg3: memref<9x1x256xf32, #tpu.memory_space<vmem>>, %arg4: memref<9x8x8xf32, #tpu.memory_space<vmem>>, %arg5: memref<8x1xf32, #tpu.memory_space<vmem>>, %arg6: memref<9x8x8xf32, #tpu.memory_space<vmem>>, %arg7: memref<8x1xf32, #tpu.memory_space<vmem>>, %arg8: memref<8x256xf32, #tpu.memory_space<vmem>>) attributes {dimension_semantics = [], scalar_prefetch = 0 : i64, scratch_operands = 0 : i64, tpu.core_type = #tpu.core_type<tc>} {
    %c0 = arith.constant 0 : index
    %c0_0 = arith.constant 0 : index
    %0 = vector.load %arg0[%c0, %c0_0] : memref<8x64xf32, #tpu.memory_space<vmem>>, vector<8x64xf32>
    %c0_1 = arith.constant 0 : index
    %c0_2 = arith.constant 0 : index
    %1 = vector.load %arg2[%c0_1, %c0_2] : memref<64x256xf32, #tpu.memory_space<vmem>>, vector<64x256xf32>
    %cst = arith.constant dense<0.000000e+00> : vector<8x256xf32>
    %2 = tpu.matmul %0, %1, %cst {dimension_numbers = #tpu.dot_dimension_numbers<[1], [0], [0], [1], [0, 0, 1, 1], [], []>} : vector<8x64xf32>, vector<64x256xf32>, vector<8x256xf32> -> vector<8x256xf32>
    %cst_3 = arith.constant 1.000000e+00 : f32
    %3 = vector.broadcast %cst_3 : f32 to vector<8x256xf32>
    %4 = arith.addf %2, %3 : vector<8x256xf32>
    %c0_4 = arith.constant 0 : index
    %c0_5 = arith.constant 0 : index
    %5 = vector.load %arg1[%c0_4, %c0_5] : memref<8x256xf32, #tpu.memory_space<vmem>>, vector<8x256xf32>
    %6 = arith.mulf %4, %5 : vector<8x256xf32>
    %c0_6 = arith.constant 0 : index
    %c0_7 = arith.constant 0 : index
    %7 = vector.load %arg5[%c0_6, %c0_7] : memref<8x1xf32, #tpu.memory_space<vmem>>, vector<8x1xf32>
    %8 = vector.shape_cast %7 : vector<8x1xf32> to vector<8x1xf32>
    %9 = vector.broadcast %8 : vector<8x1xf32> to vector<8x256xf32>
    %c17_i32 = arith.constant 17 : i32
    %10 = tpu.dynamic_rotate %6 by %c17_i32 dim 1 : vector<8x256xf32>, i32 -> vector<8x256xf32>
    %c0_8 = arith.constant 0 : index
    %c0_9 = arith.constant 0 : index
    %c0_10 = arith.constant 0 : index
    %11 = vector.load %arg3[%c0_8, %c0_9, %c0_10] : memref<9x1x256xf32, #tpu.memory_space<vmem>>, vector<1x1x256xf32>
    %12 = vector.shape_cast %11 : vector<1x1x256xf32> to vector<1x256xf32>
    %13 = vector.broadcast %12 : vector<1x256xf32> to vector<8x256xf32>
    %14 = arith.mulf %10, %13 : vector<8x256xf32>
    %c0_11 = arith.constant 0 : index
    %c0_12 = arith.constant 0 : index
    %c0_13 = arith.constant 0 : index
    %15 = vector.load %arg4[%c0_11, %c0_12, %c0_13] : memref<9x8x8xf32, #tpu.memory_space<vmem>>, vector<1x8x8xf32>
    %16 = vector.shape_cast %15 : vector<1x8x8xf32> to vector<8x8xf32>
    %cst_14 = arith.constant dense<0.000000e+00> : vector<8x256xf32>
    %17 = tpu.matmul %16, %14, %cst_14 {dimension_numbers = #tpu.dot_dimension_numbers<[1], [0], [0], [1], [0, 0, 1, 1], [], []>} : vector<8x8xf32>, vector<8x256xf32>, vector<8x256xf32> -> vector<8x256xf32>
    %18 = arith.addf %9, %17 : vector<8x256xf32>
    %c16_i32 = arith.constant 16 : i32
    %19 = tpu.dynamic_rotate %6 by %c16_i32 dim 1 : vector<8x256xf32>, i32 -> vector<8x256xf32>
    %c1 = arith.constant 1 : index
    %c0_15 = arith.constant 0 : index
    %c0_16 = arith.constant 0 : index
    %20 = vector.load %arg3[%c1, %c0_15, %c0_16] : memref<9x1x256xf32, #tpu.memory_space<vmem>>, vector<1x1x256xf32>
    %21 = vector.shape_cast %20 : vector<1x1x256xf32> to vector<1x256xf32>
    %22 = vector.broadcast %21 : vector<1x256xf32> to vector<8x256xf32>
    %23 = arith.mulf %19, %22 : vector<8x256xf32>
    %c1_17 = arith.constant 1 : index
    %c0_18 = arith.constant 0 : index
    %c0_19 = arith.constant 0 : index
    %24 = vector.load %arg4[%c1_17, %c0_18, %c0_19] : memref<9x8x8xf32, #tpu.memory_space<vmem>>, vector<1x8x8xf32>
    %25 = vector.shape_cast %24 : vector<1x8x8xf32> to vector<8x8xf32>
    %cst_20 = arith.constant dense<0.000000e+00> : vector<8x256xf32>
    %26 = tpu.matmul %25, %23, %cst_20 {dimension_numbers = #tpu.dot_dimension_numbers<[1], [0], [0], [1], [0, 0, 1, 1], [], []>} : vector<8x8xf32>, vector<8x256xf32>, vector<8x256xf32> -> vector<8x256xf32>
    %27 = arith.addf %18, %26 : vector<8x256xf32>
    %c15_i32 = arith.constant 15 : i32
    %28 = tpu.dynamic_rotate %6 by %c15_i32 dim 1 : vector<8x256xf32>, i32 -> vector<8x256xf32>
    %c2 = arith.constant 2 : index
    %c0_21 = arith.constant 0 : index
    %c0_22 = arith.constant 0 : index
    %29 = vector.load %arg3[%c2, %c0_21, %c0_22] : memref<9x1x256xf32, #tpu.memory_space<vmem>>, vector<1x1x256xf32>
    %30 = vector.shape_cast %29 : vector<1x1x256xf32> to vector<1x256xf32>
    %31 = vector.broadcast %30 : vector<1x256xf32> to vector<8x256xf32>
    %32 = arith.mulf %28, %31 : vector<8x256xf32>
    %c2_23 = arith.constant 2 : index
    %c0_24 = arith.constant 0 : index
    %c0_25 = arith.constant 0 : index
    %33 = vector.load %arg4[%c2_23, %c0_24, %c0_25] : memref<9x8x8xf32, #tpu.memory_space<vmem>>, vector<1x8x8xf32>
    %34 = vector.shape_cast %33 : vector<1x8x8xf32> to vector<8x8xf32>
    %cst_26 = arith.constant dense<0.000000e+00> : vector<8x256xf32>
    %35 = tpu.matmul %34, %32, %cst_26 {dimension_numbers = #tpu.dot_dimension_numbers<[1], [0], [0], [1], [0, 0, 1, 1], [], []>} : vector<8x8xf32>, vector<8x256xf32>, vector<8x256xf32> -> vector<8x256xf32>
    %36 = arith.addf %27, %35 : vector<8x256xf32>
    %c1_i32 = arith.constant 1 : i32
    %37 = tpu.dynamic_rotate %6 by %c1_i32 dim 1 : vector<8x256xf32>, i32 -> vector<8x256xf32>
    %c3 = arith.constant 3 : index
    %c0_27 = arith.constant 0 : index
    %c0_28 = arith.constant 0 : index
    %38 = vector.load %arg3[%c3, %c0_27, %c0_28] : memref<9x1x256xf32, #tpu.memory_space<vmem>>, vector<1x1x256xf32>
    %39 = vector.shape_cast %38 : vector<1x1x256xf32> to vector<1x256xf32>
    %40 = vector.broadcast %39 : vector<1x256xf32> to vector<8x256xf32>
    %41 = arith.mulf %37, %40 : vector<8x256xf32>
    %c3_29 = arith.constant 3 : index
    %c0_30 = arith.constant 0 : index
    %c0_31 = arith.constant 0 : index
    %42 = vector.load %arg4[%c3_29, %c0_30, %c0_31] : memref<9x8x8xf32, #tpu.memory_space<vmem>>, vector<1x8x8xf32>
    %43 = vector.shape_cast %42 : vector<1x8x8xf32> to vector<8x8xf32>
    %cst_32 = arith.constant dense<0.000000e+00> : vector<8x256xf32>
    %44 = tpu.matmul %43, %41, %cst_32 {dimension_numbers = #tpu.dot_dimension_numbers<[1], [0], [0], [1], [0, 0, 1, 1], [], []>} : vector<8x8xf32>, vector<8x256xf32>, vector<8x256xf32> -> vector<8x256xf32>
    %45 = arith.addf %36, %44 : vector<8x256xf32>
    %c4 = arith.constant 4 : index
    %c0_33 = arith.constant 0 : index
    %c0_34 = arith.constant 0 : index
    %46 = vector.load %arg4[%c4, %c0_33, %c0_34] : memref<9x8x8xf32, #tpu.memory_space<vmem>>, vector<1x8x8xf32>
    %47 = vector.shape_cast %46 : vector<1x8x8xf32> to vector<8x8xf32>
    %cst_35 = arith.constant dense<0.000000e+00> : vector<8x256xf32>
    %48 = tpu.matmul %47, %6, %cst_35 {dimension_numbers = #tpu.dot_dimension_numbers<[1], [0], [0], [1], [0, 0, 1, 1], [], []>} : vector<8x8xf32>, vector<8x256xf32>, vector<8x256xf32> -> vector<8x256xf32>
    %49 = arith.addf %45, %48 : vector<8x256xf32>
    %c255_i32 = arith.constant 255 : i32
    %50 = tpu.dynamic_rotate %6 by %c255_i32 dim 1 : vector<8x256xf32>, i32 -> vector<8x256xf32>
    %c5 = arith.constant 5 : index
    %c0_36 = arith.constant 0 : index
    %c0_37 = arith.constant 0 : index
    %51 = vector.load %arg3[%c5, %c0_36, %c0_37] : memref<9x1x256xf32, #tpu.memory_space<vmem>>, vector<1x1x256xf32>
    %52 = vector.shape_cast %51 : vector<1x1x256xf32> to vector<1x256xf32>
    %53 = vector.broadcast %52 : vector<1x256xf32> to vector<8x256xf32>
    %54 = arith.mulf %50, %53 : vector<8x256xf32>
    %c5_38 = arith.constant 5 : index
    %c0_39 = arith.constant 0 : index
    %c0_40 = arith.constant 0 : index
    %55 = vector.load %arg4[%c5_38, %c0_39, %c0_40] : memref<9x8x8xf32, #tpu.memory_space<vmem>>, vector<1x8x8xf32>
    %56 = vector.shape_cast %55 : vector<1x8x8xf32> to vector<8x8xf32>
    %cst_41 = arith.constant dense<0.000000e+00> : vector<8x256xf32>
    %57 = tpu.matmul %56, %54, %cst_41 {dimension_numbers = #tpu.dot_dimension_numbers<[1], [0], [0], [1], [0, 0, 1, 1], [], []>} : vector<8x8xf32>, vector<8x256xf32>, vector<8x256xf32> -> vector<8x256xf32>
    %58 = arith.addf %49, %57 : vector<8x256xf32>
    %c241_i32 = arith.constant 241 : i32
    %59 = tpu.dynamic_rotate %6 by %c241_i32 dim 1 : vector<8x256xf32>, i32 -> vector<8x256xf32>
    %c6 = arith.constant 6 : index
    %c0_42 = arith.constant 0 : index
    %c0_43 = arith.constant 0 : index
    %60 = vector.load %arg3[%c6, %c0_42, %c0_43] : memref<9x1x256xf32, #tpu.memory_space<vmem>>, vector<1x1x256xf32>
    %61 = vector.shape_cast %60 : vector<1x1x256xf32> to vector<1x256xf32>
    %62 = vector.broadcast %61 : vector<1x256xf32> to vector<8x256xf32>
    %63 = arith.mulf %59, %62 : vector<8x256xf32>
    %c6_44 = arith.constant 6 : index
    %c0_45 = arith.constant 0 : index
    %c0_46 = arith.constant 0 : index
    %64 = vector.load %arg4[%c6_44, %c0_45, %c0_46] : memref<9x8x8xf32, #tpu.memory_space<vmem>>, vector<1x8x8xf32>
    %65 = vector.shape_cast %64 : vector<1x8x8xf32> to vector<8x8xf32>
    %cst_47 = arith.constant dense<0.000000e+00> : vector<8x256xf32>
    %66 = tpu.matmul %65, %63, %cst_47 {dimension_numbers = #tpu.dot_dimension_numbers<[1], [0], [0], [1], [0, 0, 1, 1], [], []>} : vector<8x8xf32>, vector<8x256xf32>, vector<8x256xf32> -> vector<8x256xf32>
    %67 = arith.addf %58, %66 : vector<8x256xf32>
    %c240_i32 = arith.constant 240 : i32
    %68 = tpu.dynamic_rotate %6 by %c240_i32 dim 1 : vector<8x256xf32>, i32 -> vector<8x256xf32>
    %c7 = arith.constant 7 : index
    %c0_48 = arith.constant 0 : index
    %c0_49 = arith.constant 0 : index
    %69 = vector.load %arg3[%c7, %c0_48, %c0_49] : memref<9x1x256xf32, #tpu.memory_space<vmem>>, vector<1x1x256xf32>
    %70 = vector.shape_cast %69 : vector<1x1x256xf32> to vector<1x256xf32>
    %71 = vector.broadcast %70 : vector<1x256xf32> to vector<8x256xf32>
    %72 = arith.mulf %68, %71 : vector<8x256xf32>
    %c7_50 = arith.constant 7 : index
    %c0_51 = arith.constant 0 : index
    %c0_52 = arith.constant 0 : index
    %73 = vector.load %arg4[%c7_50, %c0_51, %c0_52] : memref<9x8x8xf32, #tpu.memory_space<vmem>>, vector<1x8x8xf32>
    %74 = vector.shape_cast %73 : vector<1x8x8xf32> to vector<8x8xf32>
    %cst_53 = arith.constant dense<0.000000e+00> : vector<8x256xf32>
    %75 = tpu.matmul %74, %72, %cst_53 {dimension_numbers = #tpu.dot_dimension_numbers<[1], [0], [0], [1], [0, 0, 1, 1], [], []>} : vector<8x8xf32>, vector<8x256xf32>, vector<8x256xf32> -> vector<8x256xf32>
    %76 = arith.addf %67, %75 : vector<8x256xf32>
    %c239_i32 = arith.constant 239 : i32
    %77 = tpu.dynamic_rotate %6 by %c239_i32 dim 1 : vector<8x256xf32>, i32 -> vector<8x256xf32>
    %c8 = arith.constant 8 : index
    %c0_54 = arith.constant 0 : index
    %c0_55 = arith.constant 0 : index
    %78 = vector.load %arg3[%c8, %c0_54, %c0_55] : memref<9x1x256xf32, #tpu.memory_space<vmem>>, vector<1x1x256xf32>
    %79 = vector.shape_cast %78 : vector<1x1x256xf32> to vector<1x256xf32>
    %80 = vector.broadcast %79 : vector<1x256xf32> to vector<8x256xf32>
    %81 = arith.mulf %77, %80 : vector<8x256xf32>
    %c8_56 = arith.constant 8 : index
    %c0_57 = arith.constant 0 : index
    %c0_58 = arith.constant 0 : index
    %82 = vector.load %arg4[%c8_56, %c0_57, %c0_58] : memref<9x8x8xf32, #tpu.memory_space<vmem>>, vector<1x8x8xf32>
    %83 = vector.shape_cast %82 : vector<1x8x8xf32> to vector<8x8xf32>
    %cst_59 = arith.constant dense<0.000000e+00> : vector<8x256xf32>
    %84 = tpu.matmul %83, %81, %cst_59 {dimension_numbers = #tpu.dot_dimension_numbers<[1], [0], [0], [1], [0, 0, 1, 1], [], []>} : vector<8x8xf32>, vector<8x256xf32>, vector<8x256xf32> -> vector<8x256xf32>
    %85 = arith.addf %76, %84 : vector<8x256xf32>
    %cst_60 = arith.constant 0.000000e+00 : f32
    %86 = vector.broadcast %cst_60 : f32 to vector<8x256xf32>
    %87 = arith.maximumf %85, %86 : vector<8x256xf32>
    %c0_61 = arith.constant 0 : index
    %c0_62 = arith.constant 0 : index
    %88 = vector.load %arg7[%c0_61, %c0_62] : memref<8x1xf32, #tpu.memory_space<vmem>>, vector<8x1xf32>
    %89 = vector.shape_cast %88 : vector<8x1xf32> to vector<8x1xf32>
    %90 = vector.broadcast %89 : vector<8x1xf32> to vector<8x256xf32>
    %c17_i32_63 = arith.constant 17 : i32
    %91 = tpu.dynamic_rotate %87 by %c17_i32_63 dim 1 : vector<8x256xf32>, i32 -> vector<8x256xf32>
    %c0_64 = arith.constant 0 : index
    %c0_65 = arith.constant 0 : index
    %c0_66 = arith.constant 0 : index
    %92 = vector.load %arg3[%c0_64, %c0_65, %c0_66] : memref<9x1x256xf32, #tpu.memory_space<vmem>>, vector<1x1x256xf32>
    %93 = vector.shape_cast %92 : vector<1x1x256xf32> to vector<1x256xf32>
    %94 = vector.broadcast %93 : vector<1x256xf32> to vector<8x256xf32>
    %95 = arith.mulf %91, %94 : vector<8x256xf32>
    %c0_67 = arith.constant 0 : index
    %c0_68 = arith.constant 0 : index
    %c0_69 = arith.constant 0 : index
    %96 = vector.load %arg6[%c0_67, %c0_68, %c0_69] : memref<9x8x8xf32, #tpu.memory_space<vmem>>, vector<1x8x8xf32>
    %97 = vector.shape_cast %96 : vector<1x8x8xf32> to vector<8x8xf32>
    %cst_70 = arith.constant dense<0.000000e+00> : vector<8x256xf32>
    %98 = tpu.matmul %97, %95, %cst_70 {dimension_numbers = #tpu.dot_dimension_numbers<[1], [0], [0], [1], [0, 0, 1, 1], [], []>} : vector<8x8xf32>, vector<8x256xf32>, vector<8x256xf32> -> vector<8x256xf32>
    %99 = arith.addf %90, %98 : vector<8x256xf32>
    %c16_i32_71 = arith.constant 16 : i32
    %100 = tpu.dynamic_rotate %87 by %c16_i32_71 dim 1 : vector<8x256xf32>, i32 -> vector<8x256xf32>
    %c1_72 = arith.constant 1 : index
    %c0_73 = arith.constant 0 : index
    %c0_74 = arith.constant 0 : index
    %101 = vector.load %arg3[%c1_72, %c0_73, %c0_74] : memref<9x1x256xf32, #tpu.memory_space<vmem>>, vector<1x1x256xf32>
    %102 = vector.shape_cast %101 : vector<1x1x256xf32> to vector<1x256xf32>
    %103 = vector.broadcast %102 : vector<1x256xf32> to vector<8x256xf32>
    %104 = arith.mulf %100, %103 : vector<8x256xf32>
    %c1_75 = arith.constant 1 : index
    %c0_76 = arith.constant 0 : index
    %c0_77 = arith.constant 0 : index
    %105 = vector.load %arg6[%c1_75, %c0_76, %c0_77] : memref<9x8x8xf32, #tpu.memory_space<vmem>>, vector<1x8x8xf32>
    %106 = vector.shape_cast %105 : vector<1x8x8xf32> to vector<8x8xf32>
    %cst_78 = arith.constant dense<0.000000e+00> : vector<8x256xf32>
    %107 = tpu.matmul %106, %104, %cst_78 {dimension_numbers = #tpu.dot_dimension_numbers<[1], [0], [0], [1], [0, 0, 1, 1], [], []>} : vector<8x8xf32>, vector<8x256xf32>, vector<8x256xf32> -> vector<8x256xf32>
    %108 = arith.addf %99, %107 : vector<8x256xf32>
    %c15_i32_79 = arith.constant 15 : i32
    %109 = tpu.dynamic_rotate %87 by %c15_i32_79 dim 1 : vector<8x256xf32>, i32 -> vector<8x256xf32>
    %c2_80 = arith.constant 2 : index
    %c0_81 = arith.constant 0 : index
    %c0_82 = arith.constant 0 : index
    %110 = vector.load %arg3[%c2_80, %c0_81, %c0_82] : memref<9x1x256xf32, #tpu.memory_space<vmem>>, vector<1x1x256xf32>
    %111 = vector.shape_cast %110 : vector<1x1x256xf32> to vector<1x256xf32>
    %112 = vector.broadcast %111 : vector<1x256xf32> to vector<8x256xf32>
    %113 = arith.mulf %109, %112 : vector<8x256xf32>
    %c2_83 = arith.constant 2 : index
    %c0_84 = arith.constant 0 : index
    %c0_85 = arith.constant 0 : index
    %114 = vector.load %arg6[%c2_83, %c0_84, %c0_85] : memref<9x8x8xf32, #tpu.memory_space<vmem>>, vector<1x8x8xf32>
    %115 = vector.shape_cast %114 : vector<1x8x8xf32> to vector<8x8xf32>
    %cst_86 = arith.constant dense<0.000000e+00> : vector<8x256xf32>
    %116 = tpu.matmul %115, %113, %cst_86 {dimension_numbers = #tpu.dot_dimension_numbers<[1], [0], [0], [1], [0, 0, 1, 1], [], []>} : vector<8x8xf32>, vector<8x256xf32>, vector<8x256xf32> -> vector<8x256xf32>
    %117 = arith.addf %108, %116 : vector<8x256xf32>
    %c1_i32_87 = arith.constant 1 : i32
    %118 = tpu.dynamic_rotate %87 by %c1_i32_87 dim 1 : vector<8x256xf32>, i32 -> vector<8x256xf32>
    %c3_88 = arith.constant 3 : index
    %c0_89 = arith.constant 0 : index
    %c0_90 = arith.constant 0 : index
    %119 = vector.load %arg3[%c3_88, %c0_89, %c0_90] : memref<9x1x256xf32, #tpu.memory_space<vmem>>, vector<1x1x256xf32>
    %120 = vector.shape_cast %119 : vector<1x1x256xf32> to vector<1x256xf32>
    %121 = vector.broadcast %120 : vector<1x256xf32> to vector<8x256xf32>
    %122 = arith.mulf %118, %121 : vector<8x256xf32>
    %c3_91 = arith.constant 3 : index
    %c0_92 = arith.constant 0 : index
    %c0_93 = arith.constant 0 : index
    %123 = vector.load %arg6[%c3_91, %c0_92, %c0_93] : memref<9x8x8xf32, #tpu.memory_space<vmem>>, vector<1x8x8xf32>
    %124 = vector.shape_cast %123 : vector<1x8x8xf32> to vector<8x8xf32>
    %cst_94 = arith.constant dense<0.000000e+00> : vector<8x256xf32>
    %125 = tpu.matmul %124, %122, %cst_94 {dimension_numbers = #tpu.dot_dimension_numbers<[1], [0], [0], [1], [0, 0, 1, 1], [], []>} : vector<8x8xf32>, vector<8x256xf32>, vector<8x256xf32> -> vector<8x256xf32>
    %126 = arith.addf %117, %125 : vector<8x256xf32>
    %c4_95 = arith.constant 4 : index
    %c0_96 = arith.constant 0 : index
    %c0_97 = arith.constant 0 : index
    %127 = vector.load %arg6[%c4_95, %c0_96, %c0_97] : memref<9x8x8xf32, #tpu.memory_space<vmem>>, vector<1x8x8xf32>
    %128 = vector.shape_cast %127 : vector<1x8x8xf32> to vector<8x8xf32>
    %cst_98 = arith.constant dense<0.000000e+00> : vector<8x256xf32>
    %129 = tpu.matmul %128, %87, %cst_98 {dimension_numbers = #tpu.dot_dimension_numbers<[1], [0], [0], [1], [0, 0, 1, 1], [], []>} : vector<8x8xf32>, vector<8x256xf32>, vector<8x256xf32> -> vector<8x256xf32>
    %130 = arith.addf %126, %129 : vector<8x256xf32>
    %c255_i32_99 = arith.constant 255 : i32
    %131 = tpu.dynamic_rotate %87 by %c255_i32_99 dim 1 : vector<8x256xf32>, i32 -> vector<8x256xf32>
    %c5_100 = arith.constant 5 : index
    %c0_101 = arith.constant 0 : index
    %c0_102 = arith.constant 0 : index
    %132 = vector.load %arg3[%c5_100, %c0_101, %c0_102] : memref<9x1x256xf32, #tpu.memory_space<vmem>>, vector<1x1x256xf32>
    %133 = vector.shape_cast %132 : vector<1x1x256xf32> to vector<1x256xf32>
    %134 = vector.broadcast %133 : vector<1x256xf32> to vector<8x256xf32>
    %135 = arith.mulf %131, %134 : vector<8x256xf32>
    %c5_103 = arith.constant 5 : index
    %c0_104 = arith.constant 0 : index
    %c0_105 = arith.constant 0 : index
    %136 = vector.load %arg6[%c5_103, %c0_104, %c0_105] : memref<9x8x8xf32, #tpu.memory_space<vmem>>, vector<1x8x8xf32>
    %137 = vector.shape_cast %136 : vector<1x8x8xf32> to vector<8x8xf32>
    %cst_106 = arith.constant dense<0.000000e+00> : vector<8x256xf32>
    %138 = tpu.matmul %137, %135, %cst_106 {dimension_numbers = #tpu.dot_dimension_numbers<[1], [0], [0], [1], [0, 0, 1, 1], [], []>} : vector<8x8xf32>, vector<8x256xf32>, vector<8x256xf32> -> vector<8x256xf32>
    %139 = arith.addf %130, %138 : vector<8x256xf32>
    %c241_i32_107 = arith.constant 241 : i32
    %140 = tpu.dynamic_rotate %87 by %c241_i32_107 dim 1 : vector<8x256xf32>, i32 -> vector<8x256xf32>
    %c6_108 = arith.constant 6 : index
    %c0_109 = arith.constant 0 : index
    %c0_110 = arith.constant 0 : index
    %141 = vector.load %arg3[%c6_108, %c0_109, %c0_110] : memref<9x1x256xf32, #tpu.memory_space<vmem>>, vector<1x1x256xf32>
    %142 = vector.shape_cast %141 : vector<1x1x256xf32> to vector<1x256xf32>
    %143 = vector.broadcast %142 : vector<1x256xf32> to vector<8x256xf32>
    %144 = arith.mulf %140, %143 : vector<8x256xf32>
    %c6_111 = arith.constant 6 : index
    %c0_112 = arith.constant 0 : index
    %c0_113 = arith.constant 0 : index
    %145 = vector.load %arg6[%c6_111, %c0_112, %c0_113] : memref<9x8x8xf32, #tpu.memory_space<vmem>>, vector<1x8x8xf32>
    %146 = vector.shape_cast %145 : vector<1x8x8xf32> to vector<8x8xf32>
    %cst_114 = arith.constant dense<0.000000e+00> : vector<8x256xf32>
    %147 = tpu.matmul %146, %144, %cst_114 {dimension_numbers = #tpu.dot_dimension_numbers<[1], [0], [0], [1], [0, 0, 1, 1], [], []>} : vector<8x8xf32>, vector<8x256xf32>, vector<8x256xf32> -> vector<8x256xf32>
    %148 = arith.addf %139, %147 : vector<8x256xf32>
    %c240_i32_115 = arith.constant 240 : i32
    %149 = tpu.dynamic_rotate %87 by %c240_i32_115 dim 1 : vector<8x256xf32>, i32 -> vector<8x256xf32>
    %c7_116 = arith.constant 7 : index
    %c0_117 = arith.constant 0 : index
    %c0_118 = arith.constant 0 : index
    %150 = vector.load %arg3[%c7_116, %c0_117, %c0_118] : memref<9x1x256xf32, #tpu.memory_space<vmem>>, vector<1x1x256xf32>
    %151 = vector.shape_cast %150 : vector<1x1x256xf32> to vector<1x256xf32>
    %152 = vector.broadcast %151 : vector<1x256xf32> to vector<8x256xf32>
    %153 = arith.mulf %149, %152 : vector<8x256xf32>
    %c7_119 = arith.constant 7 : index
    %c0_120 = arith.constant 0 : index
    %c0_121 = arith.constant 0 : index
    %154 = vector.load %arg6[%c7_119, %c0_120, %c0_121] : memref<9x8x8xf32, #tpu.memory_space<vmem>>, vector<1x8x8xf32>
    %155 = vector.shape_cast %154 : vector<1x8x8xf32> to vector<8x8xf32>
    %cst_122 = arith.constant dense<0.000000e+00> : vector<8x256xf32>
    %156 = tpu.matmul %155, %153, %cst_122 {dimension_numbers = #tpu.dot_dimension_numbers<[1], [0], [0], [1], [0, 0, 1, 1], [], []>} : vector<8x8xf32>, vector<8x256xf32>, vector<8x256xf32> -> vector<8x256xf32>
    %157 = arith.addf %148, %156 : vector<8x256xf32>
    %c239_i32_123 = arith.constant 239 : i32
    %158 = tpu.dynamic_rotate %87 by %c239_i32_123 dim 1 : vector<8x256xf32>, i32 -> vector<8x256xf32>
    %c8_124 = arith.constant 8 : index
    %c0_125 = arith.constant 0 : index
    %c0_126 = arith.constant 0 : index
    %159 = vector.load %arg3[%c8_124, %c0_125, %c0_126] : memref<9x1x256xf32, #tpu.memory_space<vmem>>, vector<1x1x256xf32>
    %160 = vector.shape_cast %159 : vector<1x1x256xf32> to vector<1x256xf32>
    %161 = vector.broadcast %160 : vector<1x256xf32> to vector<8x256xf32>
    %162 = arith.mulf %158, %161 : vector<8x256xf32>
    %c8_127 = arith.constant 8 : index
    %c0_128 = arith.constant 0 : index
    %c0_129 = arith.constant 0 : index
    %163 = vector.load %arg6[%c8_127, %c0_128, %c0_129] : memref<9x8x8xf32, #tpu.memory_space<vmem>>, vector<1x8x8xf32>
    %164 = vector.shape_cast %163 : vector<1x8x8xf32> to vector<8x8xf32>
    %cst_130 = arith.constant dense<0.000000e+00> : vector<8x256xf32>
    %165 = tpu.matmul %164, %162, %cst_130 {dimension_numbers = #tpu.dot_dimension_numbers<[1], [0], [0], [1], [0, 0, 1, 1], [], []>} : vector<8x8xf32>, vector<8x256xf32>, vector<8x256xf32> -> vector<8x256xf32>
    %166 = arith.addf %157, %165 : vector<8x256xf32>
    %167 = arith.addf %166, %6 : vector<8x256xf32>
    %cst_131 = arith.constant 0.000000e+00 : f32
    %168 = vector.broadcast %cst_131 : f32 to vector<8x256xf32>
    %169 = arith.maximumf %167, %168 : vector<8x256xf32>
    %c0_132 = arith.constant 0 : index
    %c0_133 = arith.constant 0 : index
    %170 = vector.load %arg8[%c0_132, %c0_133] : memref<8x256xf32, #tpu.memory_space<vmem>>, vector<8x256xf32>
    tpu.vector_store %arg8[%c0_132, %c0_133], %169 {strides = array<i32>} : memref<8x256xf32, #tpu.memory_space<vmem>>, vector<8x256xf32>,
    return
  }
}

</mosaic_0001>

<llo_original>
// kernel: tpu_custom_call.1
$region0: #{tpu_custom_call.1}
  #allocation0 [shape = 'u32[]', space=smem, size = 0x4, offset = 0x4, fixed_abs, tag = 'smem constant byte address 0x4 - core index']
  #allocation1 [shape = 'u32[144,128]{1,0:T(1,128)}', space=vmem, size = 0x12000, scoped, tag = 'internal scratch']
  %s0 = inlined_call_operand.vmem [shape: f32[8,64], index: 0, kind: input, shape index: {}]
  %s1 = inlined_call_operand.vmem [shape: f32[8,256], index: 1, kind: input, shape index: {}]
  %s2 = inlined_call_operand.vmem [shape: f32[64,256], index: 2, kind: input, shape index: {}]
  %s3 = inlined_call_operand.vmem [shape: f32[9,1,256], index: 3, kind: input, shape index: {}]
  %s4 = inlined_call_operand.vmem [shape: f32[9,8,8], index: 4, kind: input, shape index: {}]
  %s5 = inlined_call_operand.vmem [shape: f32[8,1], index: 5, kind: input, shape index: {}]
  %s6 = inlined_call_operand.vmem [shape: f32[9,8,8], index: 6, kind: input, shape index: {}]
  %s7 = inlined_call_operand.vmem [shape: f32[8,1], index: 7, kind: input, shape index: {}]
  %s8 = inlined_call_operand.hbm [shape: f32[8,256], index: 8, kind: output, shape index: {}]
  %s9 = sld [smem:[#allocation0]]
  $region42: #{tpu_custom_call.1} parent=0
    _
  %s11 = ssub.s32 1, %s9
  %s12 = scalar_select 0, %s11, %s9
  $region1: #{tpu_custom_call.1} parent=0
    #allocation2 [shape = 'u8[8192]{0}', space=vmem, size = 0x2000, scoped, tag = 'output window, operand 0, single buffered']
    #allocation3 [shape = 's32[1]{0}', space=sflag, size = 0x4, scoped, tag = 'scoped memory for tpu_custom_call.1']
    %13 = vsyncpa [#allocation3], 0
    // Predicated region
    $region2: #{tpu_custom_call.1} parent=1 // pred_check
      _
    $region3: #{tpu_custom_call.1} parent=1 // pred_check_branch
      %15 = sbr.rel (0) target = $region5
    $region4: #{tpu_custom_call.1} parent=1 // pred_region
      _
    $region5: #{tpu_custom_call.1} parent=1 // pred_fallthru
      _
    // Predicated region
    $region6: #{tpu_custom_call.1} parent=1 // pred_check
      _
    $region7: #{tpu_custom_call.1} parent=1 // pred_check_branch
      %17 = sbr.rel (0) target = $region9
    $region8: #{tpu_custom_call.1} parent=1 // pred_region
      _
    $region9: #{tpu_custom_call.1} parent=1 // pred_fallthru
      _
    // Predicated region
    $region10: #{tpu_custom_call.1} parent=1 // pred_check
      _
    $region11: #{tpu_custom_call.1} parent=1 // pred_check_branch
      %19 = sbr.rel (0) target = $region13
    $region12: #{tpu_custom_call.1} parent=1 // pred_region
      _
    $region13: #{tpu_custom_call.1} parent=1 // pred_fallthru
      _
    // Predicated region
    $region14: #{tpu_custom_call.1} parent=1 // pred_check
      _
    $region15: #{tpu_custom_call.1} parent=1 // pred_check_branch
      %21 = sbr.rel (0) target = $region17
    $region16: #{tpu_custom_call.1} parent=1 // pred_region
      _
    $region17: #{tpu_custom_call.1} parent=1 // pred_fallthru
      _
    // Predicated region
    $region18: #{tpu_custom_call.1} parent=1 // pred_check
      _
    $region19: #{tpu_custom_call.1} parent=1 // pred_check_branch
      %23 = sbr.rel (0) target = $region21
    $region20: #{tpu_custom_call.1} parent=1 // pred_region
      _
    $region21: #{tpu_custom_call.1} parent=1 // pred_fallthru
      _
    // Predicated region
    $region22: #{tpu_custom_call.1} parent=1 // pred_check
      _
    $region23: #{tpu_custom_call.1} parent=1 // pred_check_branch
      %25 = sbr.rel (0) target = $region25
    $region24: #{tpu_custom_call.1} parent=1 // pred_region
      _
    $region25: #{tpu_custom_call.1} parent=1 // pred_fallthru
      _
    // Predicated region
    $region26: #{tpu_custom_call.1} parent=1 // pred_check
      _
    $region27: #{tpu_custom_call.1} parent=1 // pred_check_branch
      %27 = sbr.rel (0) target = $region29
    $region28: #{tpu_custom_call.1} parent=1 // pred_region
      _
    $region29: #{tpu_custom_call.1} parent=1 // pred_fallthru
      _
    // Predicated region
    $region30: #{tpu_custom_call.1} parent=1 // pred_check
      _
    $region31: #{tpu_custom_call.1} parent=1 // pred_check_branch
      %29 = sbr.rel (0) target = $region33
    $region32: #{tpu_custom_call.1} parent=1 // pred_region
      _
    $region33: #{tpu_custom_call.1} parent=1 // pred_fallthru
      _
    %v30 = vld [vmem:[%s0] sm:$0xff]
    %v31 = vld [vmem:[%s2] sm:$0xff]
    %v32 = vld [vmem:[%s2 + $0x8] sm:$0xff]
    %v33 = vld [vmem:[%s2 + $0x10] sm:$0xff]
    %v34 = vld [vmem:[%s2 + $0x18] sm:$0xff]
    %v35 = vld [vmem:[%s2 + $0x20] sm:$0xff]
    %v36 = vld [vmem:[%s2 + $0x28] sm:$0xff]
    %v37 = vld [vmem:[%s2 + $0x30] sm:$0xff]
    %v38 = vld [vmem:[%s2 + $0x38] sm:$0xff]
    %v39 = vld [vmem:[%s2 + $0x40] sm:$0xff]
    %v40 = vld [vmem:[%s2 + $0x48] sm:$0xff]
    %v41 = vld [vmem:[%s2 + $0x50] sm:$0xff]
    %v42 = vld [vmem:[%s2 + $0x58] sm:$0xff]
    %v43 = vld [vmem:[%s2 + $0x60] sm:$0xff]
    %v44 = vld [vmem:[%s2 + $0x68] sm:$0xff]
    %v45 = vld [vmem:[%s2 + $0x70] sm:$0xff]
    %v46 = vld [vmem:[%s2 + $0x78] sm:$0xff]
    %vm47 = vcmask 523264
    %v49 = vsel %vm47, %v30, 0
    %51 = vmatprep.subr.mxu0 %v32
    %52 = vmatpush1.msra.mxu0 %v31
    %53 = vmatprep.subr.mxu0 %v34
    %54 = vmatpush1.msra.mxu0 %v33
    %55 = vmatprep.subr.mxu0 %v36
    %56 = vmatpush1.msra.mxu0 %v35
    %57 = vmatprep.subr.mxu0 %v38
    %58 = vmatpush1.msra.mxu0 %v37
    %59 = vmatprep.subr.mxu0 %v40
    %60 = vmatpush1.msra.mxu0 %v39
    %61 = vmatprep.subr.mxu0 %v42
    %62 = vmatpush1.msra.mxu0 %v41
    %63 = vmatprep.subr.mxu0 %v44
    %64 = vmatpush1.msra.mxu0 %v43
    %65 = vmatprep.subr.mxu0 %v46
    %66 = vmatpush1.msra.mxu0 %v45
    %67 = vmatprep.subr.mxu0 0.0
    %68 = vmatpush1.msra.mxu0 0.0
    %69 = vmatprep.subr.mxu0 0.0
    %70 = vmatpush1.msra.mxu0 0.0
    %71 = vmatprep.subr.mxu0 0.0
    %72 = vmatpush1.msra.mxu0 0.0
    %73 = vmatprep.subr.mxu0 0.0
    %74 = vmatpush1.msra.mxu0 0.0
    %75 = vmatprep.subr.mxu0 0.0
    %76 = vmatpush1.msra.mxu0 0.0
    %77 = vmatprep.subr.mxu0 0.0
    %78 = vmatpush1.msra.mxu0 0.0
    %79 = vmatprep.subr.mxu0 0.0
    %80 = vmatpush1.msra.mxu0 0.0
    %81 = vmatprep.subr.mxu0 0.0
    %82 = vmatpush1.msra.mxu0 0.0
    %83 = vmatprep.subr.mxu0 0.0
    %84 = vmatpush1.msra.mxu0 0.0
    %85 = vmatprep.subr.mxu0 0.0
    %86 = vmatpush1.msra.mxu0 0.0
    %87 = vmatprep.subr.mxu0 0.0
    %88 = vmatpush1.msra.mxu0 0.0
    %89 = vmatprep.subr.mxu0 0.0
    %90 = vmatpush1.msra.mxu0 0.0
    %91 = vmatprep.subr.mxu0 0.0
    %92 = vmatpush1.msra.mxu0 0.0
    %93 = vmatprep.subr.mxu0 0.0
    %94 = vmatpush1.msra.mxu0 0.0
    %95 = vmatprep.subr.mxu0 0.0
    %96 = vmatpush1.msra.mxu0 0.0
    %97 = vmatprep.subr.mxu0 0.0
    %98 = vmatpush1.msra.mxu0 0.0
    %99 = vmatprep.subr.mxu0 0.0
    %100 = vmatpush1.msra.mxu0 0.0
    %101 = vmatprep.subr.mxu0 0.0
    %102 = vmatpush1.msra.mxu0 0.0
    %103 = vmatprep.subr.mxu0 0.0
    %104 = vmatpush1.msra.mxu0 0.0
    %105 = vmatprep.subr.mxu0 0.0
    %106 = vmatpush1.msra.mxu0 0.0
    %107 = vmatprep.subr.mxu0 0.0
    %108 = vmatpush1.msra.mxu0 0.0
    %109 = vmatprep.subr.mxu0 0.0
    %110 = vmatpush1.msra.mxu0 0.0
    %111 = vmatprep.subr.mxu0 0.0
    %112 = vmatpush1.msra.mxu0 0.0
    %113 = vmatprep.subr.mxu0 0.0
    %114 = vmatpush1.msra.mxu0 0.0
    %115 = vmatprep.mubr.f32.mxu0 0.0
    %116 = vmatmul.mubr.f32.gmra.mrb[0].mxu0 %v49
    %v117 = vpop.f32.mrb[0].mxu0
    %v118 = vadd.f32 1.0, %v117
    %v119 = vpop.f32.mrb[0].mxu0
    %v120 = vadd.f32 1.0, %v119
    %121 = vdwg.mxu0
    %v122 = vld [vmem:[%s1] sm:$0xff]
    %v123 = vld [vmem:[%s1 + $0x8] sm:$0xff]
    %v124 = vmul.f32 %v118, %v122
    %v125 = vmul.f32 %v120, %v123
    %v126 = vld [vmem:[%s5] sm:$0xff]
    %128 = vset.pattern.permute.xlu0 0
    %129 = vperm.xlu0 %128, %v126
    %v130 = vpop.permute.xlu0 %129
    %132 = vrot.lane.b32.xlu0 %v124, 17
    %v133 = vpop.permute.xlu0 %132
    %134 = vrot.lane.b32.xlu0 %v125, 17
    %v135 = vpop.permute.xlu0 %134
    %v136 = vlaneseq
    %v137 = vand.u32 %v136, 127
    %vm138 = vcmp.lt.s32.totalorder %v137, 17
    %v139 = vsel %vm138, %v133, %v135
    %v140 = vsel %vm138, %v135, %v133
    %v141 = vld [vmem:[%s3] sm:$0x3]
    %v143 = vlaneseq
    %v144 = vshrl.u32 %v143, 7
    %v145 = vsub.s32 0, %v144
    %v146 = vrot.slane %v141, %v145
    %v147 = vlaneseq
    %v148 = vshrl.u32 %v147, 7
    %v149 = vsub.s32 1, %v148
    %v150 = vrot.slane %v141, %v149
    %v153 = vmul.f32 %v140, %v146
    %v154 = vmul.f32 %v139, %v150
    %v155 = vld [vmem:[%s4] sm:$0xff]
    %vm156 = vcmask 64512
    %v158 = vsel %vm156, %v155, 0
    %160 = vmatprep.subr.mxu0 %v154
    %161 = vmatpush1.msra.mxu0 %v153
    %162 = vmatprep.subr.mxu0 0.0
    %163 = vmatpush1.msra.mxu0 0.0
    %164 = vmatprep.subr.mxu0 0.0
    %165 = vmatpush1.msra.mxu0 0.0
    %166 = vmatprep.subr.mxu0 0.0
    %167 = vmatpush1.msra.mxu0 0.0
    %168 = vmatprep.subr.mxu0 0.0
    %169 = vmatpush1.msra.mxu0 0.0
    %170 = vmatprep.subr.mxu0 0.0
    %171 = vmatpush1.msra.mxu0 0.0
    %172 = vmatprep.subr.mxu0 0.0
    %173 = vmatpush1.msra.mxu0 0.0
    %174 = vmatprep.subr.mxu0 0.0
    %175 = vmatpush1.msra.mxu0 0.0
    %176 = vmatprep.subr.mxu0 0.0
    %177 = vmatpush1.msra.mxu0 0.0
    %178 = vmatprep.subr.mxu0 0.0
    %179 = vmatpush1.msra.mxu0 0.0
    %180 = vmatprep.subr.mxu0 0.0
    %181 = vmatpush1.msra.mxu0 0.0
    %182 = vmatprep.subr.mxu0 0.0
    %183 = vmatpush1.msra.mxu0 0.0
    %184 = vmatprep.subr.mxu0 0.0
    %185 = vmatpush1.msra.mxu0 0.0
    %186 = vmatprep.subr.mxu0 0.0
    %187 = vmatpush1.msra.mxu0 0.0
    %188 = vmatprep.subr.mxu0 0.0
    %189 = vmatpush1.msra.mxu0 0.0
    %190 = vmatprep.subr.mxu0 0.0
    %191 = vmatpush1.msra.mxu0 0.0
    %192 = vmatprep.subr.mxu0 0.0
    %193 = vmatpush1.msra.mxu0 0.0
    %194 = vmatprep.subr.mxu0 0.0
    %195 = vmatpush1.msra.mxu0 0.0
    %196 = vmatprep.subr.mxu0 0.0
    %197 = vmatpush1.msra.mxu0 0.0
    %198 = vmatprep.subr.mxu0 0.0
    %199 = vmatpush1.msra.mxu0 0.0
    %200 = vmatprep.subr.mxu0 0.0
    %201 = vmatpush1.msra.mxu0 0.0
    %202 = vmatprep.subr.mxu0 0.0
    %203 = vmatpush1.msra.mxu0 0.0
    %204 = vmatprep.subr.mxu0 0.0
    %205 = vmatpush1.msra.mxu0 0.0
    %206 = vmatprep.subr.mxu0 0.0
    %207 = vmatpush1.msra.mxu0 0.0
    %208 = vmatprep.subr.mxu0 0.0
    %209 = vmatpush1.msra.mxu0 0.0
    %210 = vmatprep.subr.mxu0 0.0
    %211 = vmatpush1.msra.mxu0 0.0
    %212 = vmatprep.subr.mxu0 0.0
    %213 = vmatpush1.msra.mxu0 0.0
    %214 = vmatprep.subr.mxu0 0.0
    %215 = vmatpush1.msra.mxu0 0.0
    %216 = vmatprep.subr.mxu0 0.0
    %217 = vmatpush1.msra.mxu0 0.0
    %218 = vmatprep.subr.mxu0 0.0
    %219 = vmatpush1.msra.mxu0 0.0
    %220 = vmatprep.subr.mxu0 0.0
    %221 = vmatpush1.msra.mxu0 0.0
    %222 = vmatprep.subr.mxu0 0.0
    %223 = vmatpush1.msra.mxu0 0.0
    %224 = vmatprep.mubr.f32.mxu0 0.0
    %225 = vmatmul.mubr.f32.gmra.mrb[0].mxu0 %v158
    %v226 = vpop.f32.mrb[0].mxu0
    %v227 = vadd.f32 0.0, %v226
    %v228 = vpop.f32.mrb[0].mxu0
    %v229 = vadd.f32 0.0, %v228
    %230 = vdwg.mxu0
    %v231 = vadd.f32 %v130, %v227
    %v232 = vadd.f32 %v130, %v229
    %233 = vrot.lane.b32.xlu0 %v124, 16
    %v234 = vpop.permute.xlu0 %233
    %235 = vrot.lane.b32.xlu0 %v125, 16
    %v236 = vpop.permute.xlu0 %235
    %vm237 = vcmp.lt.s32.totalorder %v137, 16
    %v238 = vsel %vm237, %v234, %v236
    %v239 = vsel %vm237, %v236, %v234
    %s240 = scalar_lea.vmem %s3, 2
    %v241 = vld [vmem:[%s240] sm:$0x3]
    %v243 = vlaneseq
    %v244 = vshrl.u32 %v243, 7
    %v245 = vsub.s32 0, %v244
    %v246 = vrot.slane %v241, %v245
    %v247 = vlaneseq
    %v248 = vshrl.u32 %v247, 7
    %v249 = vsub.s32 1, %v248
    %v250 = vrot.slane %v241, %v249
    %v253 = vmul.f32 %v239, %v246
    %v254 = vmul.f32 %v238, %v250
    %s255 = scalar_lea.vmem %s4, 8
    %v256 = vld [vmem:[%s255] sm:$0xff]
    %v258 = vsel %vm156, %v256, 0
    %260 = vmatprep.subr.mxu0 %v254
    %261 = vmatpush1.msra.mxu0 %v253
    %262 = vmatprep.subr.mxu0 0.0
    %263 = vmatpush1.msra.mxu0 0.0
    %264 = vmatprep.subr.mxu0 0.0
    %265 = vmatpush1.msra.mxu0 0.0
    %266 = vmatprep.subr.mxu0 0.0
    %267 = vmatpush1.msra.mxu0 0.0
    %268 = vmatprep.subr.mxu0 0.0
    %269 = vmatpush1.msra.mxu0 0.0
    %270 = vmatprep.subr.mxu0 0.0
    %271 = vmatpush1.msra.mxu0 0.0
    %272 = vmatprep.subr.mxu0 0.0
    %273 = vmatpush1.msra.mxu0 0.0
    %274 = vmatprep.subr.mxu0 0.0
    %275 = vmatpush1.msra.mxu0 0.0
    %276 = vmatprep.subr.mxu0 0.0
    %277 = vmatpush1.msra.mxu0 0.0
    %278 = vmatprep.subr.mxu0 0.0
    %279 = vmatpush1.msra.mxu0 0.0
    %280 = vmatprep.subr.mxu0 0.0
    %281 = vmatpush1.msra.mxu0 0.0
    %282 = vmatprep.subr.mxu0 0.0
    %283 = vmatpush1.msra.mxu0 0.0
    %284 = vmatprep.subr.mxu0 0.0
    %285 = vmatpush1.msra.mxu0 0.0
    %286 = vmatprep.subr.mxu0 0.0
    %287 = vmatpush1.msra.mxu0 0.0
    %288 = vmatprep.subr.mxu0 0.0
    %289 = vmatpush1.msra.mxu0 0.0
    %290 = vmatprep.subr.mxu0 0.0
    %291 = vmatpush1.msra.mxu0 0.0
    %292 = vmatprep.subr.mxu0 0.0
    %293 = vmatpush1.msra.mxu0 0.0
    %294 = vmatprep.subr.mxu0 0.0
    %295 = vmatpush1.msra.mxu0 0.0
    %296 = vmatprep.subr.mxu0 0.0
    %297 = vmatpush1.msra.mxu0 0.0
    %298 = vmatprep.subr.mxu0 0.0
    %299 = vmatpush1.msra.mxu0 0.0
    %300 = vmatprep.subr.mxu0 0.0
    %301 = vmatpush1.msra.mxu0 0.0
    %302 = vmatprep.subr.mxu0 0.0
    %303 = vmatpush1.msra.mxu0 0.0
    %304 = vmatprep.subr.mxu0 0.0
    %305 = vmatpush1.msra.mxu0 0.0
    %306 = vmatprep.subr.mxu0 0.0
    %307 = vmatpush1.msra.mxu0 0.0
    %308 = vmatprep.subr.mxu0 0.0
    %309 = vmatpush1.msra.mxu0 0.0
    %310 = vmatprep.subr.mxu0 0.0
    %311 = vmatpush1.msra.mxu0 0.0
    %312 = vmatprep.subr.mxu0 0.0
    %313 = vmatpush1.msra.mxu0 0.0
    %314 = vmatprep.subr.mxu0 0.0
    %315 = vmatpush1.msra.mxu0 0.0
    %316 = vmatprep.subr.mxu0 0.0
    %317 = vmatpush1.msra.mxu0 0.0
    %318 = vmatprep.subr.mxu0 0.0
    %319 = vmatpush1.msra.mxu0 0.0
    %320 = vmatprep.subr.mxu0 0.0
    %321 = vmatpush1.msra.mxu0 0.0
    %322 = vmatprep.subr.mxu0 0.0
    %323 = vmatpush1.msra.mxu0 0.0
    %324 = vmatprep.mubr.f32.mxu0 0.0
    %325 = vmatmul.mubr.f32.gmra.mrb[0].mxu0 %v258
    %v326 = vpop.f32.mrb[0].mxu0
    %v327 = vadd.f32 0.0, %v326
    %v328 = vpop.f32.mrb[0].mxu0
    %v329 = vadd.f32 0.0, %v328
    %330 = vdwg.mxu0
    %v331 = vadd.f32 %v231, %v327
    %v332 = vadd.f32 %v232, %v329
    %333 = vrot.lane.b32.xlu0 %v124, 15
    %v334 = vpop.permute.xlu0 %333
    %335 = vrot.lane.b32.xlu0 %v125, 15
    %v336 = vpop.permute.xlu0 %335
    %vm337 = vcmp.lt.s32.totalorder %v137, 15
    %v338 = vsel %vm337, %v334, %v336
    %v339 = vsel %vm337, %v336, %v334
    %s340 = scalar_lea.vmem %s3, 4
    %v341 = vld [vmem:[%s340] sm:$0x3]
    %v343 = vlaneseq
    %v344 = vshrl.u32 %v343, 7
    %v345 = vsub.s32 0, %v344
    %v346 = vrot.slane %v341, %v345
    %v347 = vlaneseq
    %v348 = vshrl.u32 %v347, 7
    %v349 = vsub.s32 1, %v348
    %v350 = vrot.slane %v341, %v349
    %v353 = vmul.f32 %v339, %v346
    %v354 = vmul.f32 %v338, %v350
    %s355 = scalar_lea.vmem %s4, 16
    %v356 = vld [vmem:[%s355] sm:$0xff]
    %v358 = vsel %vm156, %v356, 0
    %360 = vmatprep.subr.mxu0 %v354
    %361 = vmatpush1.msra.mxu0 %v353
    %362 = vmatprep.subr.mxu0 0.0
    %363 = vmatpush1.msra.mxu0 0.0
    %364 = vmatprep.subr.mxu0 0.0
    %365 = vmatpush1.msra.mxu0 0.0
    %366 = vmatprep.subr.mxu0 0.0
    %367 = vmatpush1.msra.mxu0 0.0
    %368 = vmatprep.subr.mxu0 0.0
    %369 = vmatpush1.msra.mxu0 0.0
    %370 = vmatprep.subr.mxu0 0.0
    %371 = vmatpush1.msra.mxu0 0.0
    %372 = vmatprep.subr.mxu0 0.0
    %373 = vmatpush1.msra.mxu0 0.0
    %374 = vmatprep.subr.mxu0 0.0
    %375 = vmatpush1.msra.mxu0 0.0
    %376 = vmatprep.subr.mxu0 0.0
    %377 = vmatpush1.msra.mxu0 0.0
    %378 = vmatprep.subr.mxu0 0.0
    %379 = vmatpush1.msra.mxu0 0.0
    %380 = vmatprep.subr.mxu0 0.0
    %381 = vmatpush1.msra.mxu0 0.0
    %382 = vmatprep.subr.mxu0 0.0
    %383 = vmatpush1.msra.mxu0 0.0
    %384 = vmatprep.subr.mxu0 0.0
    %385 = vmatpush1.msra.mxu0 0.0
    %386 = vmatprep.subr.mxu0 0.0
    %387 = vmatpush1.msra.mxu0 0.0
    %388 = vmatprep.subr.mxu0 0.0
    %389 = vmatpush1.msra.mxu0 0.0
    %390 = vmatprep.subr.mxu0 0.0
    %391 = vmatpush1.msra.mxu0 0.0
    %392 = vmatprep.subr.mxu0 0.0
    %393 = vmatpush1.msra.mxu0 0.0
    %394 = vmatprep.subr.mxu0 0.0
    %395 = vmatpush1.msra.mxu0 0.0
    %396 = vmatprep.subr.mxu0 0.0
    %397 = vmatpush1.msra.mxu0 0.0
    %398 = vmatprep.subr.mxu0 0.0
    %399 = vmatpush1.msra.mxu0 0.0
    %400 = vmatprep.subr.mxu0 0.0
    %401 = vmatpush1.msra.mxu0 0.0
    %402 = vmatprep.subr.mxu0 0.0
    %403 = vmatpush1.msra.mxu0 0.0
    %404 = vmatprep.subr.mxu0 0.0
    %405 = vmatpush1.msra.mxu0 0.0
    %406 = vmatprep.subr.mxu0 0.0
    %407 = vmatpush1.msra.mxu0 0.0
    %408 = vmatprep.subr.mxu0 0.0
    %409 = vmatpush1.msra.mxu0 0.0
    %410 = vmatprep.subr.mxu0 0.0
    %411 = vmatpush1.msra.mxu0 0.0
    %412 = vmatprep.subr.mxu0 0.0
    %413 = vmatpush1.msra.mxu0 0.0
    %414 = vmatprep.subr.mxu0 0.0
    %415 = vmatpush1.msra.mxu0 0.0
    %416 = vmatprep.subr.mxu0 0.0
    %417 = vmatpush1.msra.mxu0 0.0
    %418 = vmatprep.subr.mxu0 0.0
    %419 = vmatpush1.msra.mxu0 0.0
    %420 = vmatprep.subr.mxu0 0.0
    %421 = vmatpush1.msra.mxu0 0.0
    %422 = vmatprep.subr.mxu0 0.0
    %423 = vmatpush1.msra.mxu0 0.0
    %424 = vmatprep.mubr.f32.mxu0 0.0
    %425 = vmatmul.mubr.f32.gmra.mrb[0].mxu0 %v358
    %v426 = vpop.f32.mrb[0].mxu0
    %v427 = vadd.f32 0.0, %v426
    %v428 = vpop.f32.mrb[0].mxu0
    %v429 = vadd.f32 0.0, %v428
    %430 = vdwg.mxu0
    %v431 = vadd.f32 %v331, %v427
    %v432 = vadd.f32 %v332, %v429
    %433 = vrot.lane.b32.xlu0 %v124, 1
    %v434 = vpop.permute.xlu0 %433
    %435 = vrot.lane.b32.xlu0 %v125, 1
    %v436 = vpop.permute.xlu0 %435
    %vm437 = vcmp.lt.s32.totalorder %v137, 1
    %v438 = vsel %vm437, %v434, %v436
    %v439 = vsel %vm437, %v436, %v434
    %s440 = scalar_lea.vmem %s3, 6
    %v441 = vld [vmem:[%s440] sm:$0x3]
    %v443 = vlaneseq
    %v444 = vshrl.u32 %v443, 7
    %v445 = vsub.s32 0, %v444
    %v446 = vrot.slane %v441, %v445
    %v447 = vlaneseq
    %v448 = vshrl.u32 %v447, 7
    %v449 = vsub.s32 1, %v448
    %v450 = vrot.slane %v441, %v449
    %v453 = vmul.f32 %v439, %v446
    %v454 = vmul.f32 %v438, %v450
    %s455 = scalar_lea.vmem %s4, 24
    %v456 = vld [vmem:[%s455] sm:$0xff]
    %v458 = vsel %vm156, %v456, 0
    %460 = vmatprep.subr.mxu0 %v454
    %461 = vmatpush1.msra.mxu0 %v453
    %462 = vmatprep.subr.mxu0 0.0
    %463 = vmatpush1.msra.mxu0 0.0
    %464 = vmatprep.subr.mxu0 0.0
    %465 = vmatpush1.msra.mxu0 0.0
    %466 = vmatprep.subr.mxu0 0.0
    %467 = vmatpush1.msra.mxu0 0.0
    %468 = vmatprep.subr.mxu0 0.0
    %469 = vmatpush1.msra.mxu0 0.0
    %470 = vmatprep.subr.mxu0 0.0
    %471 = vmatpush1.msra.mxu0 0.0
    %472 = vmatprep.subr.mxu0 0.0
    %473 = vmatpush1.msra.mxu0 0.0
    %474 = vmatprep.subr.mxu0 0.0
    %475 = vmatpush1.msra.mxu0 0.0
    %476 = vmatprep.subr.mxu0 0.0
    %477 = vmatpush1.msra.mxu0 0.0
    %478 = vmatprep.subr.mxu0 0.0
    %479 = vmatpush1.msra.mxu0 0.0
    %480 = vmatprep.subr.mxu0 0.0
    %481 = vmatpush1.msra.mxu0 0.0
    %482 = vmatprep.subr.mxu0 0.0
    %483 = vmatpush1.msra.mxu0 0.0
    %484 = vmatprep.subr.mxu0 0.0
    %485 = vmatpush1.msra.mxu0 0.0
    %486 = vmatprep.subr.mxu0 0.0
    %487 = vmatpush1.msra.mxu0 0.0
    %488 = vmatprep.subr.mxu0 0.0
    %489 = vmatpush1.msra.mxu0 0.0
    %490 = vmatprep.subr.mxu0 0.0
    %491 = vmatpush1.msra.mxu0 0.0
    %492 = vmatprep.subr.mxu0 0.0
    %493 = vmatpush1.msra.mxu0 0.0
    %494 = vmatprep.subr.mxu0 0.0
    %495 = vmatpush1.msra.mxu0 0.0
    %496 = vmatprep.subr.mxu0 0.0
    %497 = vmatpush1.msra.mxu0 0.0
    %498 = vmatprep.subr.mxu0 0.0
    %499 = vmatpush1.msra.mxu0 0.0
    %500 = vmatprep.subr.mxu0 0.0
    %501 = vmatpush1.msra.mxu0 0.0
    %502 = vmatprep.subr.mxu0 0.0
    %503 = vmatpush1.msra.mxu0 0.0
    %504 = vmatprep.subr.mxu0 0.0
    %505 = vmatpush1.msra.mxu0 0.0
    %506 = vmatprep.subr.mxu0 0.0
    %507 = vmatpush1.msra.mxu0 0.0
    %508 = vmatprep.subr.mxu0 0.0
    %509 = vmatpush1.msra.mxu0 0.0
    %510 = vmatprep.subr.mxu0 0.0
    %511 = vmatpush1.msra.mxu0 0.0
    %512 = vmatprep.subr.mxu0 0.0
    %513 = vmatpush1.msra.mxu0 0.0
    %514 = vmatprep.subr.mxu0 0.0
    %515 = vmatpush1.msra.mxu0 0.0
    %516 = vmatprep.subr.mxu0 0.0
    %517 = vmatpush1.msra.mxu0 0.0
    %518 = vmatprep.subr.mxu0 0.0
    %519 = vmatpush1.msra.mxu0 0.0
    %520 = vmatprep.subr.mxu0 0.0
    %521 = vmatpush1.msra.mxu0 0.0
    %522 = vmatprep.subr.mxu0 0.0
    %523 = vmatpush1.msra.mxu0 0.0
    %524 = vmatprep.mubr.f32.mxu0 0.0
    %525 = vmatmul.mubr.f32.gmra.mrb[0].mxu0 %v458
    %v526 = vpop.f32.mrb[0].mxu0
    %v527 = vadd.f32 0.0, %v526
    %v528 = vpop.f32.mrb[0].mxu0
    %v529 = vadd.f32 0.0, %v528
    %530 = vdwg.mxu0
    %v531 = vadd.f32 %v431, %v527
    %v532 = vadd.f32 %v432, %v529
    %s533 = scalar_lea.vmem %s4, 32
    %v534 = vld [vmem:[%s533] sm:$0xff]
    %v536 = vsel %vm156, %v534, 0
    %538 = vmatprep.subr.mxu0 %v125
    %539 = vmatpush1.msra.mxu0 %v124
    %540 = vmatprep.subr.mxu0 0.0
    %541 = vmatpush1.msra.mxu0 0.0
    %542 = vmatprep.subr.mxu0 0.0
    %543 = vmatpush1.msra.mxu0 0.0
    %544 = vmatprep.subr.mxu0 0.0
    %545 = vmatpush1.msra.mxu0 0.0
    %546 = vmatprep.subr.mxu0 0.0
    %547 = vmatpush1.msra.mxu0 0.0
    %548 = vmatprep.subr.mxu0 0.0
    %549 = vmatpush1.msra.mxu0 0.0
    %550 = vmatprep.subr.mxu0 0.0
    %551 = vmatpush1.msra.mxu0 0.0
    %552 = vmatprep.subr.mxu0 0.0
    %553 = vmatpush1.msra.mxu0 0.0
    %554 = vmatprep.subr.mxu0 0.0
    %555 = vmatpush1.msra.mxu0 0.0
    %556 = vmatprep.subr.mxu0 0.0
    %557 = vmatpush1.msra.mxu0 0.0
    %558 = vmatprep.subr.mxu0 0.0
    %559 = vmatpush1.msra.mxu0 0.0
    %560 = vmatprep.subr.mxu0 0.0
    %561 = vmatpush1.msra.mxu0 0.0
    %562 = vmatprep.subr.mxu0 0.0
    %563 = vmatpush1.msra.mxu0 0.0
    %564 = vmatprep.subr.mxu0 0.0
    %565 = vmatpush1.msra.mxu0 0.0
    %566 = vmatprep.subr.mxu0 0.0
    %567 = vmatpush1.msra.mxu0 0.0
    %568 = vmatprep.subr.mxu0 0.0
    %569 = vmatpush1.msra.mxu0 0.0
    %570 = vmatprep.subr.mxu0 0.0
    %571 = vmatpush1.msra.mxu0 0.0
    %572 = vmatprep.subr.mxu0 0.0
    %573 = vmatpush1.msra.mxu0 0.0
    %574 = vmatprep.subr.mxu0 0.0
    %575 = vmatpush1.msra.mxu0 0.0
    %576 = vmatprep.subr.mxu0 0.0
    %577 = vmatpush1.msra.mxu0 0.0
    %578 = vmatprep.subr.mxu0 0.0
    %579 = vmatpush1.msra.mxu0 0.0
    %580 = vmatprep.subr.mxu0 0.0
    %581 = vmatpush1.msra.mxu0 0.0
    %582 = vmatprep.subr.mxu0 0.0
    %583 = vmatpush1.msra.mxu0 0.0
    %584 = vmatprep.subr.mxu0 0.0
    %585 = vmatpush1.msra.mxu0 0.0
    %586 = vmatprep.subr.mxu0 0.0
    %587 = vmatpush1.msra.mxu0 0.0
    %588 = vmatprep.subr.mxu0 0.0
    %589 = vmatpush1.msra.mxu0 0.0
    %590 = vmatprep.subr.mxu0 0.0
    %591 = vmatpush1.msra.mxu0 0.0
    %592 = vmatprep.subr.mxu0 0.0
    %593 = vmatpush1.msra.mxu0 0.0
    %594 = vmatprep.subr.mxu0 0.0
    %595 = vmatpush1.msra.mxu0 0.0
    %596 = vmatprep.subr.mxu0 0.0
    %597 = vmatpush1.msra.mxu0 0.0
    %598 = vmatprep.subr.mxu0 0.0
    %599 = vmatpush1.msra.mxu0 0.0
    %600 = vmatprep.subr.mxu0 0.0
    %601 = vmatpush1.msra.mxu0 0.0
    %602 = vmatprep.mubr.f32.mxu0 0.0
    %603 = vmatmul.mubr.f32.gmra.mrb[0].mxu0 %v536
    %v604 = vpop.f32.mrb[0].mxu0
    %v605 = vadd.f32 0.0, %v604
    %v606 = vpop.f32.mrb[0].mxu0
    %v607 = vadd.f32 0.0, %v606
    %608 = vdwg.mxu0
    %v609 = vadd.f32 %v531, %v605
    %v610 = vadd.f32 %v532, %v607
    %611 = vrot.lane.b32.xlu0 %v124, 127
    %v612 = vpop.permute.xlu0 %611
    %613 = vrot.lane.b32.xlu0 %v125, 127
    %v614 = vpop.permute.xlu0 %613
    %vm615 = vcmp.lt.s32.totalorder %v137, 127
    %v616 = vsel %vm615, %v612, %v614
    %v617 = vsel %vm615, %v614, %v612
    %s618 = scalar_lea.vmem %s3, 10
    %v619 = vld [vmem:[%s618] sm:$0x3]
    %v621 = vlaneseq
    %v622 = vshrl.u32 %v621, 7
    %v623 = vsub.s32 0, %v622
    %v624 = vrot.slane %v619, %v623
    %v625 = vlaneseq
    %v626 = vshrl.u32 %v625, 7
    %v627 = vsub.s32 1, %v626
    %v628 = vrot.slane %v619, %v627
    %v631 = vmul.f32 %v616, %v624
    %v632 = vmul.f32 %v617, %v628
    %s633 = scalar_lea.vmem %s4, 40
    %v634 = vld [vmem:[%s633] sm:$0xff]
    %v636 = vsel %vm156, %v634, 0
    %638 = vmatprep.subr.mxu0 %v632
    %639 = vmatpush1.msra.mxu0 %v631
    %640 = vmatprep.subr.mxu0 0.0
    %641 = vmatpush1.msra.mxu0 0.0
    %642 = vmatprep.subr.mxu0 0.0
    %643 = vmatpush1.msra.mxu0 0.0
    %644 = vmatprep.subr.mxu0 0.0
    %645 = vmatpush1.msra.mxu0 0.0
    %646 = vmatprep.subr.mxu0 0.0
    %647 = vmatpush1.msra.mxu0 0.0
    %648 = vmatprep.subr.mxu0 0.0
    %649 = vmatpush1.msra.mxu0 0.0
    %650 = vmatprep.subr.mxu0 0.0
    %651 = vmatpush1.msra.mxu0 0.0
    %652 = vmatprep.subr.mxu0 0.0
    %653 = vmatpush1.msra.mxu0 0.0
    %654 = vmatprep.subr.mxu0 0.0
    %655 = vmatpush1.msra.mxu0 0.0
    %656 = vmatprep.subr.mxu0 0.0
    %657 = vmatpush1.msra.mxu0 0.0
    %658 = vmatprep.subr.mxu0 0.0
    %659 = vmatpush1.msra.mxu0 0.0
    %660 = vmatprep.subr.mxu0 0.0
    %661 = vmatpush1.msra.mxu0 0.0
    %662 = vmatprep.subr.mxu0 0.0
    %663 = vmatpush1.msra.mxu0 0.0
    %664 = vmatprep.subr.mxu0 0.0
    %665 = vmatpush1.msra.mxu0 0.0
    %666 = vmatprep.subr.mxu0 0.0
    %667 = vmatpush1.msra.mxu0 0.0
    %668 = vmatprep.subr.mxu0 0.0
    %669 = vmatpush1.msra.mxu0 0.0
    %670 = vmatprep.subr.mxu0 0.0
    %671 = vmatpush1.msra.mxu0 0.0
    %672 = vmatprep.subr.mxu0 0.0
    %673 = vmatpush1.msra.mxu0 0.0
    %674 = vmatprep.subr.mxu0 0.0
    %675 = vmatpush1.msra.mxu0 0.0
    %676 = vmatprep.subr.mxu0 0.0
    %677 = vmatpush1.msra.mxu0 0.0
    %678 = vmatprep.subr.mxu0 0.0
    %679 = vmatpush1.msra.mxu0 0.0
    %680 = vmatprep.subr.mxu0 0.0
    %681 = vmatpush1.msra.mxu0 0.0
    %682 = vmatprep.subr.mxu0 0.0
    %683 = vmatpush1.msra.mxu0 0.0
    %684 = vmatprep.subr.mxu0 0.0
    %685 = vmatpush1.msra.mxu0 0.0
    %686 = vmatprep.subr.mxu0 0.0
    %687 = vmatpush1.msra.mxu0 0.0
    %688 = vmatprep.subr.mxu0 0.0
    %689 = vmatpush1.msra.mxu0 0.0
    %690 = vmatprep.subr.mxu0 0.0
    %691 = vmatpush1.msra.mxu0 0.0
    %692 = vmatprep.subr.mxu0 0.0
    %693 = vmatpush1.msra.mxu0 0.0
    %694 = vmatprep.subr.mxu0 0.0
    %695 = vmatpush1.msra.mxu0 0.0
    %696 = vmatprep.subr.mxu0 0.0
    %697 = vmatpush1.msra.mxu0 0.0
    %698 = vmatprep.subr.mxu0 0.0
    %699 = vmatpush1.msra.mxu0 0.0
    %700 = vmatprep.subr.mxu0 0.0
    %701 = vmatpush1.msra.mxu0 0.0
    %702 = vmatprep.mubr.f32.mxu0 0.0
    %703 = vmatmul.mubr.f32.gmra.mrb[0].mxu0 %v636
    %v704 = vpop.f32.mrb[0].mxu0
    %v705 = vadd.f32 0.0, %v704
    %v706 = vpop.f32.mrb[0].mxu0
    %v707 = vadd.f32 0.0, %v706
    %708 = vdwg.mxu0
    %v709 = vadd.f32 %v609, %v705
    %v710 = vadd.f32 %v610, %v707
    %711 = vrot.lane.b32.xlu0 %v124, 113
    %v712 = vpop.permute.xlu0 %711
    %713 = vrot.lane.b32.xlu0 %v125, 113
    %v714 = vpop.permute.xlu0 %713
    %vm715 = vcmp.lt.s32.totalorder %v137, 113
    %v716 = vsel %vm715, %v712, %v714
    %v717 = vsel %vm715, %v714, %v712
    %s718 = scalar_lea.vmem %s3, 12
    %v719 = vld [vmem:[%s718] sm:$0x3]
    %v721 = vlaneseq
    %v722 = vshrl.u32 %v721, 7
    %v723 = vsub.s32 0, %v722
    %v724 = vrot.slane %v719, %v723
    %v725 = vlaneseq
    %v726 = vshrl.u32 %v725, 7
    %v727 = vsub.s32 1, %v726
    %v728 = vrot.slane %v719, %v727
    %v731 = vmul.f32 %v716, %v724
    %v732 = vmul.f32 %v717, %v728
    %s733 = scalar_lea.vmem %s4, 48
    %v734 = vld [vmem:[%s733] sm:$0xff]
    %v736 = vsel %vm156, %v734, 0
    %738 = vmatprep.subr.mxu0 %v732
    %739 = vmatpush1.msra.mxu0 %v731
    %740 = vmatprep.subr.mxu0 0.0
    %741 = vmatpush1.msra.mxu0 0.0
    %742 = vmatprep.subr.mxu0 0.0
    %743 = vmatpush1.msra.mxu0 0.0
    %744 = vmatprep.subr.mxu0 0.0
    %745 = vmatpush1.msra.mxu0 0.0
    %746 = vmatprep.subr.mxu0 0.0
    %747 = vmatpush1.msra.mxu0 0.0
    %748 = vmatprep.subr.mxu0 0.0
    %749 = vmatpush1.msra.mxu0 0.0
    %750 = vmatprep.subr.mxu0 0.0
    %751 = vmatpush1.msra.mxu0 0.0
    %752 = vmatprep.subr.mxu0 0.0
    %753 = vmatpush1.msra.mxu0 0.0
    %754 = vmatprep.subr.mxu0 0.0
    %755 = vmatpush1.msra.mxu0 0.0
    %756 = vmatprep.subr.mxu0 0.0
    %757 = vmatpush1.msra.mxu0 0.0
    %758 = vmatprep.subr.mxu0 0.0
    %759 = vmatpush1.msra.mxu0 0.0
    %760 = vmatprep.subr.mxu0 0.0
    %761 = vmatpush1.msra.mxu0 0.0
    %762 = vmatprep.subr.mxu0 0.0
    %763 = vmatpush1.msra.mxu0 0.0
    %764 = vmatprep.subr.mxu0 0.0
    %765 = vmatpush1.msra.mxu0 0.0
    %766 = vmatprep.subr.mxu0 0.0
    %767 = vmatpush1.msra.mxu0 0.0
    %768 = vmatprep.subr.mxu0 0.0
    %769 = vmatpush1.msra.mxu0 0.0
    %770 = vmatprep.subr.mxu0 0.0
    %771 = vmatpush1.msra.mxu0 0.0
    %772 = vmatprep.subr.mxu0 0.0
    %773 = vmatpush1.msra.mxu0 0.0
    %774 = vmatprep.subr.mxu0 0.0
    %775 = vmatpush1.msra.mxu0 0.0
    %776 = vmatprep.subr.mxu0 0.0
    %777 = vmatpush1.msra.mxu0 0.0
    %778 = vmatprep.subr.mxu0 0.0
    %779 = vmatpush1.msra.mxu0 0.0
    %780 = vmatprep.subr.mxu0 0.0
    %781 = vmatpush1.msra.mxu0 0.0
    %782 = vmatprep.subr.mxu0 0.0
    %783 = vmatpush1.msra.mxu0 0.0
    %784 = vmatprep.subr.mxu0 0.0
    %785 = vmatpush1.msra.mxu0 0.0
    %786 = vmatprep.subr.mxu0 0.0
    %787 = vmatpush1.msra.mxu0 0.0
    %788 = vmatprep.subr.mxu0 0.0
    %789 = vmatpush1.msra.mxu0 0.0
    %790 = vmatprep.subr.mxu0 0.0
    %791 = vmatpush1.msra.mxu0 0.0
    %792 = vmatprep.subr.mxu0 0.0
    %793 = vmatpush1.msra.mxu0 0.0
    %794 = vmatprep.subr.mxu0 0.0
    %795 = vmatpush1.msra.mxu0 0.0
    %796 = vmatprep.subr.mxu0 0.0
    %797 = vmatpush1.msra.mxu0 0.0
    %798 = vmatprep.subr.mxu0 0.0
    %799 = vmatpush1.msra.mxu0 0.0
    %800 = vmatprep.subr.mxu0 0.0
    %801 = vmatpush1.msra.mxu0 0.0
    %802 = vmatprep.mubr.f32.mxu0 0.0
    %803 = vmatmul.mubr.f32.gmra.mrb[0].mxu0 %v736
    %v804 = vpop.f32.mrb[0].mxu0
    %v805 = vadd.f32 0.0, %v804
    %v806 = vpop.f32.mrb[0].mxu0
    %v807 = vadd.f32 0.0, %v806
    %808 = vdwg.mxu0
    %v809 = vadd.f32 %v709, %v805
    %v810 = vadd.f32 %v710, %v807
    %811 = vrot.lane.b32.xlu0 %v124, 112
    %v812 = vpop.permute.xlu0 %811
    %813 = vrot.lane.b32.xlu0 %v125, 112
    %v814 = vpop.permute.xlu0 %813
    %vm815 = vcmp.lt.s32.totalorder %v137, 112
    %v816 = vsel %vm815, %v812, %v814
    %v817 = vsel %vm815, %v814, %v812
    %s818 = scalar_lea.vmem %s3, 14
    %v819 = vld [vmem:[%s818] sm:$0x3]
    %v821 = vlaneseq
    %v822 = vshrl.u32 %v821, 7
    %v823 = vsub.s32 0, %v822
    %v824 = vrot.slane %v819, %v823
    %v825 = vlaneseq
    %v826 = vshrl.u32 %v825, 7
    %v827 = vsub.s32 1, %v826
    %v828 = vrot.slane %v819, %v827
    %v831 = vmul.f32 %v816, %v824
    %v832 = vmul.f32 %v817, %v828
    %s833 = scalar_lea.vmem %s4, 56
    %v834 = vld [vmem:[%s833] sm:$0xff]
    %v836 = vsel %vm156, %v834, 0
    %838 = vmatprep.subr.mxu0 %v832
    %839 = vmatpush1.msra.mxu0 %v831
    %840 = vmatprep.subr.mxu0 0.0
    %841 = vmatpush1.msra.mxu0 0.0
    %842 = vmatprep.subr.mxu0 0.0
    %843 = vmatpush1.msra.mxu0 0.0
    %844 = vmatprep.subr.mxu0 0.0
    %845 = vmatpush1.msra.mxu0 0.0
    %846 = vmatprep.subr.mxu0 0.0
    %847 = vmatpush1.msra.mxu0 0.0
    %848 = vmatprep.subr.mxu0 0.0
    %849 = vmatpush1.msra.mxu0 0.0
    %850 = vmatprep.subr.mxu0 0.0
    %851 = vmatpush1.msra.mxu0 0.0
    %852 = vmatprep.subr.mxu0 0.0
    %853 = vmatpush1.msra.mxu0 0.0
    %854 = vmatprep.subr.mxu0 0.0
    %855 = vmatpush1.msra.mxu0 0.0
    %856 = vmatprep.subr.mxu0 0.0
    %857 = vmatpush1.msra.mxu0 0.0
    %858 = vmatprep.subr.mxu0 0.0
    %859 = vmatpush1.msra.mxu0 0.0
    %860 = vmatprep.subr.mxu0 0.0
    %861 = vmatpush1.msra.mxu0 0.0
    %862 = vmatprep.subr.mxu0 0.0
    %863 = vmatpush1.msra.mxu0 0.0
    %864 = vmatprep.subr.mxu0 0.0
    %865 = vmatpush1.msra.mxu0 0.0
    %866 = vmatprep.subr.mxu0 0.0
    %867 = vmatpush1.msra.mxu0 0.0
    %868 = vmatprep.subr.mxu0 0.0
    %869 = vmatpush1.msra.mxu0 0.0
    %870 = vmatprep.subr.mxu0 0.0
    %871 = vmatpush1.msra.mxu0 0.0
    %872 = vmatprep.subr.mxu0 0.0
    %873 = vmatpush1.msra.mxu0 0.0
    %874 = vmatprep.subr.mxu0 0.0
    %875 = vmatpush1.msra.mxu0 0.0
    %876 = vmatprep.subr.mxu0 0.0
    %877 = vmatpush1.msra.mxu0 0.0
    %878 = vmatprep.subr.mxu0 0.0
    %879 = vmatpush1.msra.mxu0 0.0
    %880 = vmatprep.subr.mxu0 0.0
    %881 = vmatpush1.msra.mxu0 0.0
    %882 = vmatprep.subr.mxu0 0.0
    %883 = vmatpush1.msra.mxu0 0.0
    %884 = vmatprep.subr.mxu0 0.0
    %885 = vmatpush1.msra.mxu0 0.0
    %886 = vmatprep.subr.mxu0 0.0
    %887 = vmatpush1.msra.mxu0 0.0
    %888 = vmatprep.subr.mxu0 0.0
    %889 = vmatpush1.msra.mxu0 0.0
    %890 = vmatprep.subr.mxu0 0.0
    %891 = vmatpush1.msra.mxu0 0.0
    %892 = vmatprep.subr.mxu0 0.0
    %893 = vmatpush1.msra.mxu0 0.0
    %894 = vmatprep.subr.mxu0 0.0
    %895 = vmatpush1.msra.mxu0 0.0
    %896 = vmatprep.subr.mxu0 0.0
    %897 = vmatpush1.msra.mxu0 0.0
    %898 = vmatprep.subr.mxu0 0.0
    %899 = vmatpush1.msra.mxu0 0.0
    %900 = vmatprep.subr.mxu0 0.0
    %901 = vmatpush1.msra.mxu0 0.0
    %902 = vmatprep.mubr.f32.mxu0 0.0
    %903 = vmatmul.mubr.f32.gmra.mrb[0].mxu0 %v836
    %v904 = vpop.f32.mrb[0].mxu0
    %v905 = vadd.f32 0.0, %v904
    %v906 = vpop.f32.mrb[0].mxu0
    %v907 = vadd.f32 0.0, %v906
    %908 = vdwg.mxu0
    %v909 = vadd.f32 %v809, %v905
    %v910 = vadd.f32 %v810, %v907
    %911 = vrot.lane.b32.xlu0 %v124, 111
    %v912 = vpop.permute.xlu0 %911
    %913 = vrot.lane.b32.xlu0 %v125, 111
    %v914 = vpop.permute.xlu0 %913
    %vm915 = vcmp.lt.s32.totalorder %v137, 111
    %v916 = vsel %vm915, %v912, %v914
    %v917 = vsel %vm915, %v914, %v912
    %s918 = scalar_lea.vmem %s3, 16
    %v919 = vld [vmem:[%s918] sm:$0x3]
    %v921 = vlaneseq
    %v922 = vshrl.u32 %v921, 7
    %v923 = vsub.s32 0, %v922
    %v924 = vrot.slane %v919, %v923
    %v925 = vlaneseq
    %v926 = vshrl.u32 %v925, 7
    %v927 = vsub.s32 1, %v926
    %v928 = vrot.slane %v919, %v927
    %v931 = vmul.f32 %v916, %v924
    %v932 = vmul.f32 %v917, %v928
    %s933 = scalar_lea.vmem %s4, 64
    %v934 = vld [vmem:[%s933] sm:$0xff]
    %v936 = vsel %vm156, %v934, 0
    %938 = vmatprep.subr.mxu0 %v932
    %939 = vmatpush1.msra.mxu0 %v931
    %940 = vmatprep.subr.mxu0 0.0
    %941 = vmatpush1.msra.mxu0 0.0
    %942 = vmatprep.subr.mxu0 0.0
    %943 = vmatpush1.msra.mxu0 0.0
    %944 = vmatprep.subr.mxu0 0.0
    %945 = vmatpush1.msra.mxu0 0.0
    %946 = vmatprep.subr.mxu0 0.0
    %947 = vmatpush1.msra.mxu0 0.0
    %948 = vmatprep.subr.mxu0 0.0
    %949 = vmatpush1.msra.mxu0 0.0
    %950 = vmatprep.subr.mxu0 0.0
    %951 = vmatpush1.msra.mxu0 0.0
    %952 = vmatprep.subr.mxu0 0.0
    %953 = vmatpush1.msra.mxu0 0.0
    %954 = vmatprep.subr.mxu0 0.0
    %955 = vmatpush1.msra.mxu0 0.0
    %956 = vmatprep.subr.mxu0 0.0
    %957 = vmatpush1.msra.mxu0 0.0
    %958 = vmatprep.subr.mxu0 0.0
    %959 = vmatpush1.msra.mxu0 0.0
    %960 = vmatprep.subr.mxu0 0.0
    %961 = vmatpush1.msra.mxu0 0.0
    %962 = vmatprep.subr.mxu0 0.0
    %963 = vmatpush1.msra.mxu0 0.0
    %964 = vmatprep.subr.mxu0 0.0
    %965 = vmatpush1.msra.mxu0 0.0
    %966 = vmatprep.subr.mxu0 0.0
    %967 = vmatpush1.msra.mxu0 0.0
    %968 = vmatprep.subr.mxu0 0.0
    %969 = vmatpush1.msra.mxu0 0.0
    %970 = vmatprep.subr.mxu0 0.0
    %971 = vmatpush1.msra.mxu0 0.0
    %972 = vmatprep.subr.mxu0 0.0
    %973 = vmatpush1.msra.mxu0 0.0
    %974 = vmatprep.subr.mxu0 0.0
    %975 = vmatpush1.msra.mxu0 0.0
    %976 = vmatprep.subr.mxu0 0.0
    %977 = vmatpush1.msra.mxu0 0.0
    %978 = vmatprep.subr.mxu0 0.0
    %979 = vmatpush1.msra.mxu0 0.0
    %980 = vmatprep.subr.mxu0 0.0
    %981 = vmatpush1.msra.mxu0 0.0
    %982 = vmatprep.subr.mxu0 0.0
    %983 = vmatpush1.msra.mxu0 0.0
    %984 = vmatprep.subr.mxu0 0.0
    %985 = vmatpush1.msra.mxu0 0.0
    %986 = vmatprep.subr.mxu0 0.0
    %987 = vmatpush1.msra.mxu0 0.0
    %988 = vmatprep.subr.mxu0 0.0
    %989 = vmatpush1.msra.mxu0 0.0
    %990 = vmatprep.subr.mxu0 0.0
    %991 = vmatpush1.msra.mxu0 0.0
    %992 = vmatprep.subr.mxu0 0.0
    %993 = vmatpush1.msra.mxu0 0.0
    %994 = vmatprep.subr.mxu0 0.0
    %995 = vmatpush1.msra.mxu0 0.0
    %996 = vmatprep.subr.mxu0 0.0
    %997 = vmatpush1.msra.mxu0 0.0
    %998 = vmatprep.subr.mxu0 0.0
    %999 = vmatpush1.msra.mxu0 0.0
    %1000 = vmatprep.subr.mxu0 0.0
    %1001 = vmatpush1.msra.mxu0 0.0
    %1002 = vmatprep.mubr.f32.mxu0 0.0
    %1003 = vmatmul.mubr.f32.gmra.mrb[0].mxu0 %v936
    %v1004 = vpop.f32.mrb[0].mxu0
    %v1005 = vadd.f32 0.0, %v1004
    %v1006 = vpop.f32.mrb[0].mxu0
    %v1007 = vadd.f32 0.0, %v1006
    %1008 = vdwg.mxu0
    %v1009 = vadd.f32 %v909, %v1005
    %v1010 = vadd.f32 %v910, %v1007
    %v1011 = vmax.f32 %v1009, 0.0
    %v1012 = vmax.f32 %v1010, 0.0
    %v1013 = vld [vmem:[%s7] sm:$0xff]
    %1015 = vset.pattern.permute.xlu0 0
    %1016 = vperm.xlu0 %1015, %v1013
    %v1017 = vpop.permute.xlu0 %1016
    %1019 = vrot.lane.b32.xlu0 %v1011, 17
    %v1020 = vpop.permute.xlu0 %1019
    %1021 = vrot.lane.b32.xlu0 %v1012, 17
    %v1022 = vpop.permute.xlu0 %1021
    %v1023 = vsel %vm138, %v1020, %v1022
    %v1024 = vsel %vm138, %v1022, %v1020
    %v1025 = vmul.f32 %v1024, %v146
    %v1026 = vmul.f32 %v1023, %v150
    %v1027 = vld [vmem:[%s6] sm:$0xff]
    %v1029 = vsel %vm156, %v1027, 0
    %1031 = vmatprep.subr.mxu0 %v1026
    %1032 = vmatpush1.msra.mxu0 %v1025
    %1033 = vmatprep.subr.mxu0 0.0
    %1034 = vmatpush1.msra.mxu0 0.0
    %1035 = vmatprep.subr.mxu0 0.0
    %1036 = vmatpush1.msra.mxu0 0.0
    %1037 = vmatprep.subr.mxu0 0.0
    %1038 = vmatpush1.msra.mxu0 0.0
    %1039 = vmatprep.subr.mxu0 0.0
    %1040 = vmatpush1.msra.mxu0 0.0
    %1041 = vmatprep.subr.mxu0 0.0
    %1042 = vmatpush1.msra.mxu0 0.0
    %1043 = vmatprep.subr.mxu0 0.0
    %1044 = vmatpush1.msra.mxu0 0.0
    %1045 = vmatprep.subr.mxu0 0.0
    %1046 = vmatpush1.msra.mxu0 0.0
    %1047 = vmatprep.subr.mxu0 0.0
    %1048 = vmatpush1.msra.mxu0 0.0
    %1049 = vmatprep.subr.mxu0 0.0
    %1050 = vmatpush1.msra.mxu0 0.0
    %1051 = vmatprep.subr.mxu0 0.0
    %1052 = vmatpush1.msra.mxu0 0.0
    %1053 = vmatprep.subr.mxu0 0.0
    %1054 = vmatpush1.msra.mxu0 0.0
    %1055 = vmatprep.subr.mxu0 0.0
    %1056 = vmatpush1.msra.mxu0 0.0
    %1057 = vmatprep.subr.mxu0 0.0
    %1058 = vmatpush1.msra.mxu0 0.0
    %1059 = vmatprep.subr.mxu0 0.0
    %1060 = vmatpush1.msra.mxu0 0.0
    %1061 = vmatprep.subr.mxu0 0.0
    %1062 = vmatpush1.msra.mxu0 0.0
    %1063 = vmatprep.subr.mxu0 0.0
    %1064 = vmatpush1.msra.mxu0 0.0
    %1065 = vmatprep.subr.mxu0 0.0
    %1066 = vmatpush1.msra.mxu0 0.0
    %1067 = vmatprep.subr.mxu0 0.0
    %1068 = vmatpush1.msra.mxu0 0.0
    %1069 = vmatprep.subr.mxu0 0.0
    %1070 = vmatpush1.msra.mxu0 0.0
    %1071 = vmatprep.subr.mxu0 0.0
    %1072 = vmatpush1.msra.mxu0 0.0
    %1073 = vmatprep.subr.mxu0 0.0
    %1074 = vmatpush1.msra.mxu0 0.0
    %1075 = vmatprep.subr.mxu0 0.0
    %1076 = vmatpush1.msra.mxu0 0.0
    %1077 = vmatprep.subr.mxu0 0.0
    %1078 = vmatpush1.msra.mxu0 0.0
    %1079 = vmatprep.subr.mxu0 0.0
    %1080 = vmatpush1.msra.mxu0 0.0
    %1081 = vmatprep.subr.mxu0 0.0
    %1082 = vmatpush1.msra.mxu0 0.0
    %1083 = vmatprep.subr.mxu0 0.0
    %1084 = vmatpush1.msra.mxu0 0.0
    %1085 = vmatprep.subr.mxu0 0.0
    %1086 = vmatpush1.msra.mxu0 0.0
    %1087 = vmatprep.subr.mxu0 0.0
    %1088 = vmatpush1.msra.mxu0 0.0
    %1089 = vmatprep.subr.mxu0 0.0
    %1090 = vmatpush1.msra.mxu0 0.0
    %1091 = vmatprep.subr.mxu0 0.0
    %1092 = vmatpush1.msra.mxu0 0.0
    %1093 = vmatprep.subr.mxu0 0.0
    %1094 = vmatpush1.msra.mxu0 0.0
    %1095 = vmatprep.mubr.f32.mxu0 0.0
    %1096 = vmatmul.mubr.f32.gmra.mrb[0].mxu0 %v1029
    %v1097 = vpop.f32.mrb[0].mxu0
    %v1098 = vadd.f32 0.0, %v1097
    %v1099 = vpop.f32.mrb[0].mxu0
    %v1100 = vadd.f32 0.0, %v1099
    %1101 = vdwg.mxu0
    %v1102 = vadd.f32 %v1017, %v1098
    %v1103 = vadd.f32 %v1017, %v1100
    %1104 = vrot.lane.b32.xlu0 %v1011, 16
    %v1105 = vpop.permute.xlu0 %1104
    %1106 = vrot.lane.b32.xlu0 %v1012, 16
    %v1107 = vpop.permute.xlu0 %1106
    %v1108 = vsel %vm237, %v1105, %v1107
    %v1109 = vsel %vm237, %v1107, %v1105
    %v1110 = vmul.f32 %v1109, %v246
    %v1111 = vmul.f32 %v1108, %v250
    %s1112 = scalar_lea.vmem %s6, 8
    %v1113 = vld [vmem:[%s1112] sm:$0xff]
    %v1115 = vsel %vm156, %v1113, 0
    %1117 = vmatprep.subr.mxu0 %v1111
    %1118 = vmatpush1.msra.mxu0 %v1110
    %1119 = vmatprep.subr.mxu0 0.0
    %1120 = vmatpush1.msra.mxu0 0.0
    %1121 = vmatprep.subr.mxu0 0.0
    %1122 = vmatpush1.msra.mxu0 0.0
    %1123 = vmatprep.subr.mxu0 0.0
    %1124 = vmatpush1.msra.mxu0 0.0
    %1125 = vmatprep.subr.mxu0 0.0
    %1126 = vmatpush1.msra.mxu0 0.0
    %1127 = vmatprep.subr.mxu0 0.0
    %1128 = vmatpush1.msra.mxu0 0.0
    %1129 = vmatprep.subr.mxu0 0.0
    %1130 = vmatpush1.msra.mxu0 0.0
    %1131 = vmatprep.subr.mxu0 0.0
    %1132 = vmatpush1.msra.mxu0 0.0
    %1133 = vmatprep.subr.mxu0 0.0
    %1134 = vmatpush1.msra.mxu0 0.0
    %1135 = vmatprep.subr.mxu0 0.0
    %1136 = vmatpush1.msra.mxu0 0.0
    %1137 = vmatprep.subr.mxu0 0.0
    %1138 = vmatpush1.msra.mxu0 0.0
    %1139 = vmatprep.subr.mxu0 0.0
    %1140 = vmatpush1.msra.mxu0 0.0
    %1141 = vmatprep.subr.mxu0 0.0
    %1142 = vmatpush1.msra.mxu0 0.0
    %1143 = vmatprep.subr.mxu0 0.0
    %1144 = vmatpush1.msra.mxu0 0.0
    %1145 = vmatprep.subr.mxu0 0.0
    %1146 = vmatpush1.msra.mxu0 0.0
    %1147 = vmatprep.subr.mxu0 0.0
    %1148 = vmatpush1.msra.mxu0 0.0
    %1149 = vmatprep.subr.mxu0 0.0
    %1150 = vmatpush1.msra.mxu0 0.0
    %1151 = vmatprep.subr.mxu0 0.0
    %1152 = vmatpush1.msra.mxu0 0.0
    %1153 = vmatprep.subr.mxu0 0.0
    %1154 = vmatpush1.msra.mxu0 0.0
    %1155 = vmatprep.subr.mxu0 0.0
    %1156 = vmatpush1.msra.mxu0 0.0
    %1157 = vmatprep.subr.mxu0 0.0
    %1158 = vmatpush1.msra.mxu0 0.0
    %1159 = vmatprep.subr.mxu0 0.0
    %1160 = vmatpush1.msra.mxu0 0.0
    %1161 = vmatprep.subr.mxu0 0.0
    %1162 = vmatpush1.msra.mxu0 0.0
    %1163 = vmatprep.subr.mxu0 0.0
    %1164 = vmatpush1.msra.mxu0 0.0
    %1165 = vmatprep.subr.mxu0 0.0
    %1166 = vmatpush1.msra.mxu0 0.0
    %1167 = vmatprep.subr.mxu0 0.0
    %1168 = vmatpush1.msra.mxu0 0.0
    %1169 = vmatprep.subr.mxu0 0.0
    %1170 = vmatpush1.msra.mxu0 0.0
    %1171 = vmatprep.subr.mxu0 0.0
    %1172 = vmatpush1.msra.mxu0 0.0
    %1173 = vmatprep.subr.mxu0 0.0
    %1174 = vmatpush1.msra.mxu0 0.0
    %1175 = vmatprep.subr.mxu0 0.0
    %1176 = vmatpush1.msra.mxu0 0.0
    %1177 = vmatprep.subr.mxu0 0.0
    %1178 = vmatpush1.msra.mxu0 0.0
    %1179 = vmatprep.subr.mxu0 0.0
    %1180 = vmatpush1.msra.mxu0 0.0
    %1181 = vmatprep.mubr.f32.mxu0 0.0
    %1182 = vmatmul.mubr.f32.gmra.mrb[0].mxu0 %v1115
    %v1183 = vpop.f32.mrb[0].mxu0
    %v1184 = vadd.f32 0.0, %v1183
    %v1185 = vpop.f32.mrb[0].mxu0
    %v1186 = vadd.f32 0.0, %v1185
    %1187 = vdwg.mxu0
    %v1188 = vadd.f32 %v1102, %v1184
    %v1189 = vadd.f32 %v1103, %v1186
    %1190 = vrot.lane.b32.xlu0 %v1011, 15
    %v1191 = vpop.permute.xlu0 %1190
    %1192 = vrot.lane.b32.xlu0 %v1012, 15
    %v1193 = vpop.permute.xlu0 %1192
    %v1194 = vsel %vm337, %v1191, %v1193
    %v1195 = vsel %vm337, %v1193, %v1191
    %v1196 = vmul.f32 %v1195, %v346
    %v1197 = vmul.f32 %v1194, %v350
    %s1198 = scalar_lea.vmem %s6, 16
    %v1199 = vld [vmem:[%s1198] sm:$0xff]
    %v1201 = vsel %vm156, %v1199, 0
    %1203 = vmatprep.subr.mxu0 %v1197
    %1204 = vmatpush1.msra.mxu0 %v1196
    %1205 = vmatprep.subr.mxu0 0.0
    %1206 = vmatpush1.msra.mxu0 0.0
    %1207 = vmatprep.subr.mxu0 0.0
    %1208 = vmatpush1.msra.mxu0 0.0
    %1209 = vmatprep.subr.mxu0 0.0
    %1210 = vmatpush1.msra.mxu0 0.0
    %1211 = vmatprep.subr.mxu0 0.0
    %1212 = vmatpush1.msra.mxu0 0.0
    %1213 = vmatprep.subr.mxu0 0.0
    %1214 = vmatpush1.msra.mxu0 0.0
    %1215 = vmatprep.subr.mxu0 0.0
    %1216 = vmatpush1.msra.mxu0 0.0
    %1217 = vmatprep.subr.mxu0 0.0
    %1218 = vmatpush1.msra.mxu0 0.0
    %1219 = vmatprep.subr.mxu0 0.0
    %1220 = vmatpush1.msra.mxu0 0.0
    %1221 = vmatprep.subr.mxu0 0.0
    %1222 = vmatpush1.msra.mxu0 0.0
    %1223 = vmatprep.subr.mxu0 0.0
    %1224 = vmatpush1.msra.mxu0 0.0
    %1225 = vmatprep.subr.mxu0 0.0
    %1226 = vmatpush1.msra.mxu0 0.0
    %1227 = vmatprep.subr.mxu0 0.0
    %1228 = vmatpush1.msra.mxu0 0.0
    %1229 = vmatprep.subr.mxu0 0.0
    %1230 = vmatpush1.msra.mxu0 0.0
    %1231 = vmatprep.subr.mxu0 0.0
    %1232 = vmatpush1.msra.mxu0 0.0
    %1233 = vmatprep.subr.mxu0 0.0
    %1234 = vmatpush1.msra.mxu0 0.0
    %1235 = vmatprep.subr.mxu0 0.0
    %1236 = vmatpush1.msra.mxu0 0.0
    %1237 = vmatprep.subr.mxu0 0.0
    %1238 = vmatpush1.msra.mxu0 0.0
    %1239 = vmatprep.subr.mxu0 0.0
    %1240 = vmatpush1.msra.mxu0 0.0
    %1241 = vmatprep.subr.mxu0 0.0
    %1242 = vmatpush1.msra.mxu0 0.0
    %1243 = vmatprep.subr.mxu0 0.0
    %1244 = vmatpush1.msra.mxu0 0.0
    %1245 = vmatprep.subr.mxu0 0.0
    %1246 = vmatpush1.msra.mxu0 0.0
    %1247 = vmatprep.subr.mxu0 0.0
    %1248 = vmatpush1.msra.mxu0 0.0
    %1249 = vmatprep.subr.mxu0 0.0
    %1250 = vmatpush1.msra.mxu0 0.0
    %1251 = vmatprep.subr.mxu0 0.0
    %1252 = vmatpush1.msra.mxu0 0.0
    %1253 = vmatprep.subr.mxu0 0.0
    %1254 = vmatpush1.msra.mxu0 0.0
    %1255 = vmatprep.subr.mxu0 0.0
    %1256 = vmatpush1.msra.mxu0 0.0
    %1257 = vmatprep.subr.mxu0 0.0
    %1258 = vmatpush1.msra.mxu0 0.0
    %1259 = vmatprep.subr.mxu0 0.0
    %1260 = vmatpush1.msra.mxu0 0.0
    %1261 = vmatprep.subr.mxu0 0.0
    %1262 = vmatpush1.msra.mxu0 0.0
    %1263 = vmatprep.subr.mxu0 0.0
    %1264 = vmatpush1.msra.mxu0 0.0
    %1265 = vmatprep.subr.mxu0 0.0
    %1266 = vmatpush1.msra.mxu0 0.0
    %1267 = vmatprep.mubr.f32.mxu0 0.0
    %1268 = vmatmul.mubr.f32.gmra.mrb[0].mxu0 %v1201
    %v1269 = vpop.f32.mrb[0].mxu0
    %v1270 = vadd.f32 0.0, %v1269
    %v1271 = vpop.f32.mrb[0].mxu0
    %v1272 = vadd.f32 0.0, %v1271
    %1273 = vdwg.mxu0
    %v1274 = vadd.f32 %v1188, %v1270
    %v1275 = vadd.f32 %v1189, %v1272
    %1276 = vrot.lane.b32.xlu0 %v1011, 1
    %v1277 = vpop.permute.xlu0 %1276
    %1278 = vrot.lane.b32.xlu0 %v1012, 1
    %v1279 = vpop.permute.xlu0 %1278
    %v1280 = vsel %vm437, %v1277, %v1279
    %v1281 = vsel %vm437, %v1279, %v1277
    %v1282 = vmul.f32 %v1281, %v446
    %v1283 = vmul.f32 %v1280, %v450
    %s1284 = scalar_lea.vmem %s6, 24
    %v1285 = vld [vmem:[%s1284] sm:$0xff]
    %v1287 = vsel %vm156, %v1285, 0
    %1289 = vmatprep.subr.mxu0 %v1283
    %1290 = vmatpush1.msra.mxu0 %v1282
    %1291 = vmatprep.subr.mxu0 0.0
    %1292 = vmatpush1.msra.mxu0 0.0
    %1293 = vmatprep.subr.mxu0 0.0
    %1294 = vmatpush1.msra.mxu0 0.0
    %1295 = vmatprep.subr.mxu0 0.0
    %1296 = vmatpush1.msra.mxu0 0.0
    %1297 = vmatprep.subr.mxu0 0.0
    %1298 = vmatpush1.msra.mxu0 0.0
    %1299 = vmatprep.subr.mxu0 0.0
    %1300 = vmatpush1.msra.mxu0 0.0
    %1301 = vmatprep.subr.mxu0 0.0
    %1302 = vmatpush1.msra.mxu0 0.0
    %1303 = vmatprep.subr.mxu0 0.0
    %1304 = vmatpush1.msra.mxu0 0.0
    %1305 = vmatprep.subr.mxu0 0.0
    %1306 = vmatpush1.msra.mxu0 0.0
    %1307 = vmatprep.subr.mxu0 0.0
    %1308 = vmatpush1.msra.mxu0 0.0
    %1309 = vmatprep.subr.mxu0 0.0
    %1310 = vmatpush1.msra.mxu0 0.0
    %1311 = vmatprep.subr.mxu0 0.0
    %1312 = vmatpush1.msra.mxu0 0.0
    %1313 = vmatprep.subr.mxu0 0.0
    %1314 = vmatpush1.msra.mxu0 0.0
    %1315 = vmatprep.subr.mxu0 0.0
    %1316 = vmatpush1.msra.mxu0 0.0
    %1317 = vmatprep.subr.mxu0 0.0
    %1318 = vmatpush1.msra.mxu0 0.0
    %1319 = vmatprep.subr.mxu0 0.0
    %1320 = vmatpush1.msra.mxu0 0.0
    %1321 = vmatprep.subr.mxu0 0.0
    %1322 = vmatpush1.msra.mxu0 0.0
    %1323 = vmatprep.subr.mxu0 0.0
    %1324 = vmatpush1.msra.mxu0 0.0
    %1325 = vmatprep.subr.mxu0 0.0
    %1326 = vmatpush1.msra.mxu0 0.0
    %1327 = vmatprep.subr.mxu0 0.0
    %1328 = vmatpush1.msra.mxu0 0.0
    %1329 = vmatprep.subr.mxu0 0.0
    %1330 = vmatpush1.msra.mxu0 0.0
    %1331 = vmatprep.subr.mxu0 0.0
    %1332 = vmatpush1.msra.mxu0 0.0
    %1333 = vmatprep.subr.mxu0 0.0
    %1334 = vmatpush1.msra.mxu0 0.0
    %1335 = vmatprep.subr.mxu0 0.0
    %1336 = vmatpush1.msra.mxu0 0.0
    %1337 = vmatprep.subr.mxu0 0.0
    %1338 = vmatpush1.msra.mxu0 0.0
    %1339 = vmatprep.subr.mxu0 0.0
    %1340 = vmatpush1.msra.mxu0 0.0
    %1341 = vmatprep.subr.mxu0 0.0
    %1342 = vmatpush1.msra.mxu0 0.0
    %1343 = vmatprep.subr.mxu0 0.0
    %1344 = vmatpush1.msra.mxu0 0.0
    %1345 = vmatprep.subr.mxu0 0.0
    %1346 = vmatpush1.msra.mxu0 0.0
    %1347 = vmatprep.subr.mxu0 0.0
    %1348 = vmatpush1.msra.mxu0 0.0
    %1349 = vmatprep.subr.mxu0 0.0
    %1350 = vmatpush1.msra.mxu0 0.0
    %1351 = vmatprep.subr.mxu0 0.0
    %1352 = vmatpush1.msra.mxu0 0.0
    %1353 = vmatprep.mubr.f32.mxu0 0.0
    %1354 = vmatmul.mubr.f32.gmra.mrb[0].mxu0 %v1287
    %v1355 = vpop.f32.mrb[0].mxu0
    %v1356 = vadd.f32 0.0, %v1355
    %v1357 = vpop.f32.mrb[0].mxu0
    %v1358 = vadd.f32 0.0, %v1357
    %1359 = vdwg.mxu0
    %v1360 = vadd.f32 %v1274, %v1356
    %v1361 = vadd.f32 %v1275, %v1358
    %s1362 = scalar_lea.vmem %s6, 32
    %v1363 = vld [vmem:[%s1362] sm:$0xff]
    %v1365 = vsel %vm156, %v1363, 0
    %1367 = vmatprep.subr.mxu0 %v1012
    %1368 = vmatpush1.msra.mxu0 %v1011
    %1369 = vmatprep.subr.mxu0 0.0
    %1370 = vmatpush1.msra.mxu0 0.0
    %1371 = vmatprep.subr.mxu0 0.0
    %1372 = vmatpush1.msra.mxu0 0.0
    %1373 = vmatprep.subr.mxu0 0.0
    %1374 = vmatpush1.msra.mxu0 0.0
    %1375 = vmatprep.subr.mxu0 0.0
    %1376 = vmatpush1.msra.mxu0 0.0
    %1377 = vmatprep.subr.mxu0 0.0
    %1378 = vmatpush1.msra.mxu0 0.0
    %1379 = vmatprep.subr.mxu0 0.0
    %1380 = vmatpush1.msra.mxu0 0.0
    %1381 = vmatprep.subr.mxu0 0.0
    %1382 = vmatpush1.msra.mxu0 0.0
    %1383 = vmatprep.subr.mxu0 0.0
    %1384 = vmatpush1.msra.mxu0 0.0
    %1385 = vmatprep.subr.mxu0 0.0
    %1386 = vmatpush1.msra.mxu0 0.0
    %1387 = vmatprep.subr.mxu0 0.0
    %1388 = vmatpush1.msra.mxu0 0.0
    %1389 = vmatprep.subr.mxu0 0.0
    %1390 = vmatpush1.msra.mxu0 0.0
    %1391 = vmatprep.subr.mxu0 0.0
    %1392 = vmatpush1.msra.mxu0 0.0
    %1393 = vmatprep.subr.mxu0 0.0
    %1394 = vmatpush1.msra.mxu0 0.0
    %1395 = vmatprep.subr.mxu0 0.0
    %1396 = vmatpush1.msra.mxu0 0.0
    %1397 = vmatprep.subr.mxu0 0.0
    %1398 = vmatpush1.msra.mxu0 0.0
    %1399 = vmatprep.subr.mxu0 0.0
    %1400 = vmatpush1.msra.mxu0 0.0
    %1401 = vmatprep.subr.mxu0 0.0
    %1402 = vmatpush1.msra.mxu0 0.0
    %1403 = vmatprep.subr.mxu0 0.0
    %1404 = vmatpush1.msra.mxu0 0.0
    %1405 = vmatprep.subr.mxu0 0.0
    %1406 = vmatpush1.msra.mxu0 0.0
    %1407 = vmatprep.subr.mxu0 0.0
    %1408 = vmatpush1.msra.mxu0 0.0
    %1409 = vmatprep.subr.mxu0 0.0
    %1410 = vmatpush1.msra.mxu0 0.0
    %1411 = vmatprep.subr.mxu0 0.0
    %1412 = vmatpush1.msra.mxu0 0.0
    %1413 = vmatprep.subr.mxu0 0.0
    %1414 = vmatpush1.msra.mxu0 0.0
    %1415 = vmatprep.subr.mxu0 0.0
    %1416 = vmatpush1.msra.mxu0 0.0
    %1417 = vmatprep.subr.mxu0 0.0
    %1418 = vmatpush1.msra.mxu0 0.0
    %1419 = vmatprep.subr.mxu0 0.0
    %1420 = vmatpush1.msra.mxu0 0.0
    %1421 = vmatprep.subr.mxu0 0.0
    %1422 = vmatpush1.msra.mxu0 0.0
    %1423 = vmatprep.subr.mxu0 0.0
    %1424 = vmatpush1.msra.mxu0 0.0
    %1425 = vmatprep.subr.mxu0 0.0
    %1426 = vmatpush1.msra.mxu0 0.0
    %1427 = vmatprep.subr.mxu0 0.0
    %1428 = vmatpush1.msra.mxu0 0.0
    %1429 = vmatprep.subr.mxu0 0.0
    %1430 = vmatpush1.msra.mxu0 0.0
    %1431 = vmatprep.mubr.f32.mxu0 0.0
    %1432 = vmatmul.mubr.f32.gmra.mrb[0].mxu0 %v1365
    %v1433 = vpop.f32.mrb[0].mxu0
    %v1434 = vadd.f32 0.0, %v1433
    %v1435 = vpop.f32.mrb[0].mxu0
    %v1436 = vadd.f32 0.0, %v1435
    %1437 = vdwg.mxu0
    %v1438 = vadd.f32 %v1360, %v1434
    %v1439 = vadd.f32 %v1361, %v1436
    %1440 = vrot.lane.b32.xlu0 %v1011, 127
    %v1441 = vpop.permute.xlu0 %1440
    %1442 = vrot.lane.b32.xlu0 %v1012, 127
    %v1443 = vpop.permute.xlu0 %1442
    %v1444 = vsel %vm615, %v1441, %v1443
    %v1445 = vsel %vm615, %v1443, %v1441
    %v1446 = vmul.f32 %v1444, %v624
    %v1447 = vmul.f32 %v1445, %v628
    %s1448 = scalar_lea.vmem %s6, 40
    %v1449 = vld [vmem:[%s1448] sm:$0xff]
    %v1451 = vsel %vm156, %v1449, 0
    %1453 = vmatprep.subr.mxu0 %v1447
    %1454 = vmatpush1.msra.mxu0 %v1446
    %1455 = vmatprep.subr.mxu0 0.0
    %1456 = vmatpush1.msra.mxu0 0.0
    %1457 = vmatprep.subr.mxu0 0.0
    %1458 = vmatpush1.msra.mxu0 0.0
    %1459 = vmatprep.subr.mxu0 0.0
    %1460 = vmatpush1.msra.mxu0 0.0
    %1461 = vmatprep.subr.mxu0 0.0
    %1462 = vmatpush1.msra.mxu0 0.0
    %1463 = vmatprep.subr.mxu0 0.0
    %1464 = vmatpush1.msra.mxu0 0.0
    %1465 = vmatprep.subr.mxu0 0.0
    %1466 = vmatpush1.msra.mxu0 0.0
    %1467 = vmatprep.subr.mxu0 0.0
    %1468 = vmatpush1.msra.mxu0 0.0
    %1469 = vmatprep.subr.mxu0 0.0
    %1470 = vmatpush1.msra.mxu0 0.0
    %1471 = vmatprep.subr.mxu0 0.0
    %1472 = vmatpush1.msra.mxu0 0.0
    %1473 = vmatprep.subr.mxu0 0.0
    %1474 = vmatpush1.msra.mxu0 0.0
    %1475 = vmatprep.subr.mxu0 0.0
    %1476 = vmatpush1.msra.mxu0 0.0
    %1477 = vmatprep.subr.mxu0 0.0
    %1478 = vmatpush1.msra.mxu0 0.0
    %1479 = vmatprep.subr.mxu0 0.0
    %1480 = vmatpush1.msra.mxu0 0.0
    %1481 = vmatprep.subr.mxu0 0.0
    %1482 = vmatpush1.msra.mxu0 0.0
    %1483 = vmatprep.subr.mxu0 0.0
    %1484 = vmatpush1.msra.mxu0 0.0
    %1485 = vmatprep.subr.mxu0 0.0
    %1486 = vmatpush1.msra.mxu0 0.0
    %1487 = vmatprep.subr.mxu0 0.0
    %1488 = vmatpush1.msra.mxu0 0.0
    %1489 = vmatprep.subr.mxu0 0.0
    %1490 = vmatpush1.msra.mxu0 0.0
    %1491 = vmatprep.subr.mxu0 0.0
    %1492 = vmatpush1.msra.mxu0 0.0
    %1493 = vmatprep.subr.mxu0 0.0
    %1494 = vmatpush1.msra.mxu0 0.0
    %1495 = vmatprep.subr.mxu0 0.0
    %1496 = vmatpush1.msra.mxu0 0.0
    %1497 = vmatprep.subr.mxu0 0.0
    %1498 = vmatpush1.msra.mxu0 0.0
    %1499 = vmatprep.subr.mxu0 0.0
    %1500 = vmatpush1.msra.mxu0 0.0
    %1501 = vmatprep.subr.mxu0 0.0
    %1502 = vmatpush1.msra.mxu0 0.0
    %1503 = vmatprep.subr.mxu0 0.0
    %1504 = vmatpush1.msra.mxu0 0.0
    %1505 = vmatprep.subr.mxu0 0.0
    %1506 = vmatpush1.msra.mxu0 0.0
    %1507 = vmatprep.subr.mxu0 0.0
    %1508 = vmatpush1.msra.mxu0 0.0
    %1509 = vmatprep.subr.mxu0 0.0
    %1510 = vmatpush1.msra.mxu0 0.0
    %1511 = vmatprep.subr.mxu0 0.0
    %1512 = vmatpush1.msra.mxu0 0.0
    %1513 = vmatprep.subr.mxu0 0.0
    %1514 = vmatpush1.msra.mxu0 0.0
    %1515 = vmatprep.subr.mxu0 0.0
    %1516 = vmatpush1.msra.mxu0 0.0
    %1517 = vmatprep.mubr.f32.mxu0 0.0
    %1518 = vmatmul.mubr.f32.gmra.mrb[0].mxu0 %v1451
    %v1519 = vpop.f32.mrb[0].mxu0
    %v1520 = vadd.f32 0.0, %v1519
    %v1521 = vpop.f32.mrb[0].mxu0
    %v1522 = vadd.f32 0.0, %v1521
    %1523 = vdwg.mxu0
    %v1524 = vadd.f32 %v1438, %v1520
    %v1525 = vadd.f32 %v1439, %v1522
    %1526 = vrot.lane.b32.xlu0 %v1011, 113
    %v1527 = vpop.permute.xlu0 %1526
    %1528 = vrot.lane.b32.xlu0 %v1012, 113
    %v1529 = vpop.permute.xlu0 %1528
    %v1530 = vsel %vm715, %v1527, %v1529
    %v1531 = vsel %vm715, %v1529, %v1527
    %v1532 = vmul.f32 %v1530, %v724
    %v1533 = vmul.f32 %v1531, %v728
    %s1534 = scalar_lea.vmem %s6, 48
    %v1535 = vld [vmem:[%s1534] sm:$0xff]
    %v1537 = vsel %vm156, %v1535, 0
    %1539 = vmatprep.subr.mxu0 %v1533
    %1540 = vmatpush1.msra.mxu0 %v1532
    %1541 = vmatprep.subr.mxu0 0.0
    %1542 = vmatpush1.msra.mxu0 0.0
    %1543 = vmatprep.subr.mxu0 0.0
    %1544 = vmatpush1.msra.mxu0 0.0
    %1545 = vmatprep.subr.mxu0 0.0
    %1546 = vmatpush1.msra.mxu0 0.0
    %1547 = vmatprep.subr.mxu0 0.0
    %1548 = vmatpush1.msra.mxu0 0.0
    %1549 = vmatprep.subr.mxu0 0.0
    %1550 = vmatpush1.msra.mxu0 0.0
    %1551 = vmatprep.subr.mxu0 0.0
    %1552 = vmatpush1.msra.mxu0 0.0
    %1553 = vmatprep.subr.mxu0 0.0
    %1554 = vmatpush1.msra.mxu0 0.0
    %1555 = vmatprep.subr.mxu0 0.0
    %1556 = vmatpush1.msra.mxu0 0.0
    %1557 = vmatprep.subr.mxu0 0.0
    %1558 = vmatpush1.msra.mxu0 0.0
    %1559 = vmatprep.subr.mxu0 0.0
    %1560 = vmatpush1.msra.mxu0 0.0
    %1561 = vmatprep.subr.mxu0 0.0
    %1562 = vmatpush1.msra.mxu0 0.0
    %1563 = vmatprep.subr.mxu0 0.0
    %1564 = vmatpush1.msra.mxu0 0.0
    %1565 = vmatprep.subr.mxu0 0.0
    %1566 = vmatpush1.msra.mxu0 0.0
    %1567 = vmatprep.subr.mxu0 0.0
    %1568 = vmatpush1.msra.mxu0 0.0
    %1569 = vmatprep.subr.mxu0 0.0
    %1570 = vmatpush1.msra.mxu0 0.0
    %1571 = vmatprep.subr.mxu0 0.0
    %1572 = vmatpush1.msra.mxu0 0.0
    %1573 = vmatprep.subr.mxu0 0.0
    %1574 = vmatpush1.msra.mxu0 0.0
    %1575 = vmatprep.subr.mxu0 0.0
    %1576 = vmatpush1.msra.mxu0 0.0
    %1577 = vmatprep.subr.mxu0 0.0
    %1578 = vmatpush1.msra.mxu0 0.0
    %1579 = vmatprep.subr.mxu0 0.0
    %1580 = vmatpush1.msra.mxu0 0.0
    %1581 = vmatprep.subr.mxu0 0.0
    %1582 = vmatpush1.msra.mxu0 0.0
    %1583 = vmatprep.subr.mxu0 0.0
    %1584 = vmatpush1.msra.mxu0 0.0
    %1585 = vmatprep.subr.mxu0 0.0
    %1586 = vmatpush1.msra.mxu0 0.0
    %1587 = vmatprep.subr.mxu0 0.0
    %1588 = vmatpush1.msra.mxu0 0.0
    %1589 = vmatprep.subr.mxu0 0.0
    %1590 = vmatpush1.msra.mxu0 0.0
    %1591 = vmatprep.subr.mxu0 0.0
    %1592 = vmatpush1.msra.mxu0 0.0
    %1593 = vmatprep.subr.mxu0 0.0
    %1594 = vmatpush1.msra.mxu0 0.0
    %1595 = vmatprep.subr.mxu0 0.0
    %1596 = vmatpush1.msra.mxu0 0.0
    %1597 = vmatprep.subr.mxu0 0.0
    %1598 = vmatpush1.msra.mxu0 0.0
    %1599 = vmatprep.subr.mxu0 0.0
    %1600 = vmatpush1.msra.mxu0 0.0
    %1601 = vmatprep.subr.mxu0 0.0
    %1602 = vmatpush1.msra.mxu0 0.0
    %1603 = vmatprep.mubr.f32.mxu0 0.0
    %1604 = vmatmul.mubr.f32.gmra.mrb[0].mxu0 %v1537
    %v1605 = vpop.f32.mrb[0].mxu0
    %v1606 = vadd.f32 0.0, %v1605
    %v1607 = vpop.f32.mrb[0].mxu0
    %v1608 = vadd.f32 0.0, %v1607
    %1609 = vdwg.mxu0
    %v1610 = vadd.f32 %v1524, %v1606
    %v1611 = vadd.f32 %v1525, %v1608
    %1612 = vrot.lane.b32.xlu0 %v1011, 112
    %v1613 = vpop.permute.xlu0 %1612
    %1614 = vrot.lane.b32.xlu0 %v1012, 112
    %v1615 = vpop.permute.xlu0 %1614
    %v1616 = vsel %vm815, %v1613, %v1615
    %v1617 = vsel %vm815, %v1615, %v1613
    %v1618 = vmul.f32 %v1616, %v824
    %v1619 = vmul.f32 %v1617, %v828
    %s1620 = scalar_lea.vmem %s6, 56
    %v1621 = vld [vmem:[%s1620] sm:$0xff]
    %v1623 = vsel %vm156, %v1621, 0
    %1625 = vmatprep.subr.mxu0 %v1619
    %1626 = vmatpush1.msra.mxu0 %v1618
    %1627 = vmatprep.subr.mxu0 0.0
    %1628 = vmatpush1.msra.mxu0 0.0
    %1629 = vmatprep.subr.mxu0 0.0
    %1630 = vmatpush1.msra.mxu0 0.0
    %1631 = vmatprep.subr.mxu0 0.0
    %1632 = vmatpush1.msra.mxu0 0.0
    %1633 = vmatprep.subr.mxu0 0.0
    %1634 = vmatpush1.msra.mxu0 0.0
    %1635 = vmatprep.subr.mxu0 0.0
    %1636 = vmatpush1.msra.mxu0 0.0
    %1637 = vmatprep.subr.mxu0 0.0
    %1638 = vmatpush1.msra.mxu0 0.0
    %1639 = vmatprep.subr.mxu0 0.0
    %1640 = vmatpush1.msra.mxu0 0.0
    %1641 = vmatprep.subr.mxu0 0.0
    %1642 = vmatpush1.msra.mxu0 0.0
    %1643 = vmatprep.subr.mxu0 0.0
    %1644 = vmatpush1.msra.mxu0 0.0
    %1645 = vmatprep.subr.mxu0 0.0
    %1646 = vmatpush1.msra.mxu0 0.0
    %1647 = vmatprep.subr.mxu0 0.0
    %1648 = vmatpush1.msra.mxu0 0.0
    %1649 = vmatprep.subr.mxu0 0.0
    %1650 = vmatpush1.msra.mxu0 0.0
    %1651 = vmatprep.subr.mxu0 0.0
    %1652 = vmatpush1.msra.mxu0 0.0
    %1653 = vmatprep.subr.mxu0 0.0
    %1654 = vmatpush1.msra.mxu0 0.0
    %1655 = vmatprep.subr.mxu0 0.0
    %1656 = vmatpush1.msra.mxu0 0.0
    %1657 = vmatprep.subr.mxu0 0.0
    %1658 = vmatpush1.msra.mxu0 0.0
    %1659 = vmatprep.subr.mxu0 0.0
    %1660 = vmatpush1.msra.mxu0 0.0
    %1661 = vmatprep.subr.mxu0 0.0
    %1662 = vmatpush1.msra.mxu0 0.0
    %1663 = vmatprep.subr.mxu0 0.0
    %1664 = vmatpush1.msra.mxu0 0.0
    %1665 = vmatprep.subr.mxu0 0.0
    %1666 = vmatpush1.msra.mxu0 0.0
    %1667 = vmatprep.subr.mxu0 0.0
    %1668 = vmatpush1.msra.mxu0 0.0
    %1669 = vmatprep.subr.mxu0 0.0
    %1670 = vmatpush1.msra.mxu0 0.0
    %1671 = vmatprep.subr.mxu0 0.0
    %1672 = vmatpush1.msra.mxu0 0.0
    %1673 = vmatprep.subr.mxu0 0.0
    %1674 = vmatpush1.msra.mxu0 0.0
    %1675 = vmatprep.subr.mxu0 0.0
    %1676 = vmatpush1.msra.mxu0 0.0
    %1677 = vmatprep.subr.mxu0 0.0
    %1678 = vmatpush1.msra.mxu0 0.0
    %1679 = vmatprep.subr.mxu0 0.0
    %1680 = vmatpush1.msra.mxu0 0.0
    %1681 = vmatprep.subr.mxu0 0.0
    %1682 = vmatpush1.msra.mxu0 0.0
    %1683 = vmatprep.subr.mxu0 0.0
    %1684 = vmatpush1.msra.mxu0 0.0
    %1685 = vmatprep.subr.mxu0 0.0
    %1686 = vmatpush1.msra.mxu0 0.0
    %1687 = vmatprep.subr.mxu0 0.0
    %1688 = vmatpush1.msra.mxu0 0.0
    %1689 = vmatprep.mubr.f32.mxu0 0.0
    %1690 = vmatmul.mubr.f32.gmra.mrb[0].mxu0 %v1623
    %v1691 = vpop.f32.mrb[0].mxu0
    %v1692 = vadd.f32 0.0, %v1691
    %v1693 = vpop.f32.mrb[0].mxu0
    %v1694 = vadd.f32 0.0, %v1693
    %1695 = vdwg.mxu0
    %v1696 = vadd.f32 %v1610, %v1692
    %v1697 = vadd.f32 %v1611, %v1694
    %1698 = vrot.lane.b32.xlu0 %v1011, 111
    %v1699 = vpop.permute.xlu0 %1698
    %1700 = vrot.lane.b32.xlu0 %v1012, 111
    %v1701 = vpop.permute.xlu0 %1700
    %v1702 = vsel %vm915, %v1699, %v1701
    %v1703 = vsel %vm915, %v1701, %v1699
    %v1704 = vmul.f32 %v1702, %v924
    %v1705 = vmul.f32 %v1703, %v928
    %s1706 = scalar_lea.vmem %s6, 64
    %v1707 = vld [vmem:[%s1706] sm:$0xff]
    %v1709 = vsel %vm156, %v1707, 0
    %1711 = vmatprep.subr.mxu0 %v1705
    %1712 = vmatpush1.msra.mxu0 %v1704
    %1713 = vmatprep.subr.mxu0 0.0
    %1714 = vmatpush1.msra.mxu0 0.0
    %1715 = vmatprep.subr.mxu0 0.0
    %1716 = vmatpush1.msra.mxu0 0.0
    %1717 = vmatprep.subr.mxu0 0.0
    %1718 = vmatpush1.msra.mxu0 0.0
    %1719 = vmatprep.subr.mxu0 0.0
    %1720 = vmatpush1.msra.mxu0 0.0
    %1721 = vmatprep.subr.mxu0 0.0
    %1722 = vmatpush1.msra.mxu0 0.0
    %1723 = vmatprep.subr.mxu0 0.0
    %1724 = vmatpush1.msra.mxu0 0.0
    %1725 = vmatprep.subr.mxu0 0.0
    %1726 = vmatpush1.msra.mxu0 0.0
    %1727 = vmatprep.subr.mxu0 0.0
    %1728 = vmatpush1.msra.mxu0 0.0
    %1729 = vmatprep.subr.mxu0 0.0
    %1730 = vmatpush1.msra.mxu0 0.0
    %1731 = vmatprep.subr.mxu0 0.0
    %1732 = vmatpush1.msra.mxu0 0.0
    %1733 = vmatprep.subr.mxu0 0.0
    %1734 = vmatpush1.msra.mxu0 0.0
    %1735 = vmatprep.subr.mxu0 0.0
    %1736 = vmatpush1.msra.mxu0 0.0
    %1737 = vmatprep.subr.mxu0 0.0
    %1738 = vmatpush1.msra.mxu0 0.0
    %1739 = vmatprep.subr.mxu0 0.0
    %1740 = vmatpush1.msra.mxu0 0.0
    %1741 = vmatprep.subr.mxu0 0.0
    %1742 = vmatpush1.msra.mxu0 0.0
    %1743 = vmatprep.subr.mxu0 0.0
    %1744 = vmatpush1.msra.mxu0 0.0
    %1745 = vmatprep.subr.mxu0 0.0
    %1746 = vmatpush1.msra.mxu0 0.0
    %1747 = vmatprep.subr.mxu0 0.0
    %1748 = vmatpush1.msra.mxu0 0.0
    %1749 = vmatprep.subr.mxu0 0.0
    %1750 = vmatpush1.msra.mxu0 0.0
    %1751 = vmatprep.subr.mxu0 0.0
    %1752 = vmatpush1.msra.mxu0 0.0
    %1753 = vmatprep.subr.mxu0 0.0
    %1754 = vmatpush1.msra.mxu0 0.0
    %1755 = vmatprep.subr.mxu0 0.0
    %1756 = vmatpush1.msra.mxu0 0.0
    %1757 = vmatprep.subr.mxu0 0.0
    %1758 = vmatpush1.msra.mxu0 0.0
    %1759 = vmatprep.subr.mxu0 0.0
    %1760 = vmatpush1.msra.mxu0 0.0
    %1761 = vmatprep.subr.mxu0 0.0
    %1762 = vmatpush1.msra.mxu0 0.0
    %1763 = vmatprep.subr.mxu0 0.0
    %1764 = vmatpush1.msra.mxu0 0.0
    %1765 = vmatprep.subr.mxu0 0.0
    %1766 = vmatpush1.msra.mxu0 0.0
    %1767 = vmatprep.subr.mxu0 0.0
    %1768 = vmatpush1.msra.mxu0 0.0
    %1769 = vmatprep.subr.mxu0 0.0
    %1770 = vmatpush1.msra.mxu0 0.0
    %1771 = vmatprep.subr.mxu0 0.0
    %1772 = vmatpush1.msra.mxu0 0.0
    %1773 = vmatprep.subr.mxu0 0.0
    %1774 = vmatpush1.msra.mxu0 0.0
    %1775 = vmatprep.mubr.f32.mxu0 0.0
    %1776 = vmatmul.mubr.f32.gmra.mrb[0].mxu0 %v1709
    %v1777 = vpop.f32.mrb[0].mxu0
    %v1778 = vadd.f32 0.0, %v1777
    %v1779 = vpop.f32.mrb[0].mxu0
    %v1780 = vadd.f32 0.0, %v1779
    %1781 = vdwg.mxu0
    %v1782 = vadd.f32 %v1696, %v1778
    %v1783 = vadd.f32 %v1697, %v1780
    %v1784 = vadd.f32 %v1782, %v124
    %v1785 = vadd.f32 %v1783, %v125
    %v1786 = vmax.f32 %v1784, 0.0
    %v1787 = vmax.f32 %v1785, 0.0
    %1788 = vst [vmem:[#allocation2] sm:$0xff] %v1786
    %1789 = vst [vmem:[#allocation2 + $0x8] sm:$0xff] %v1787
    // Predicated region
    $region34: #{tpu_custom_call.1} parent=1 // pred_check
      _
    $region35: #{tpu_custom_call.1} parent=1 // pred_check_branch
      %1791 = sbr.rel (0) target = $region37
    $region36: #{tpu_custom_call.1} parent=1 // pred_region
      %s1793 = ssub.s32 256, 256
      %1794 = vsyncadd [#allocation3], %s1793
      %s1796 = sshll.u32 [#allocation2], 4
      %s1797 = int_to_ptr.vmem [resolvable:$true] %s1796
      %1799 = dma.vmem_to_hbm [thread:$0]  %s1797, 256, %s8, [#allocation3]
    $region37: #{tpu_custom_call.1} parent=1 // pred_fallthru
      _
    // Predicated region
    $region38: #{tpu_custom_call.1} parent=1 // pred_check
      _
    $region39: #{tpu_custom_call.1} parent=1 // pred_check_branch
      %1801 = sbr.rel (0) target = $region41
    $region40: #{tpu_custom_call.1} parent=1 // pred_region
      %1802 = dma.done [#allocation3], 256
    $region41: #{tpu_custom_call.1} parent=1 // pred_fallthru
      _
    %1803 = vsyncpa [#allocation3], 1

</llo_original>
